<compile_context>
chip_gen: v7x
topology: tpu7x:2x2x1
jax: 0.10.0
libtpu: 0.0.40
codegen_flags: <defaults>
</compile_context>

<pallas_src>
import math
import functools

import jax
import jax.numpy as jnp
from jax.experimental import pallas as pl
from jax.experimental.pallas import tpu as pltpu


# ---------------------------------------------------------------------------
# Tiling helpers
# ---------------------------------------------------------------------------

def _pick_tile(dim, target, aligns=(128,)):
    """Largest divisor of `dim` that is <= target and a multiple of an entry
    in `aligns` (tried in order); falls back to the full extent (always a
    legal block shape) only when no aligned divisor exists."""
    if dim <= target:
        return dim
    for align in aligns:
        t = (target // align) * align
        while t >= align:
            if dim % t == 0:
                return t
            t -= align
    return dim  # full-extent fallback (legal; may be VMEM-heavy)


def _default_exp_dtype():
    """bf16 exp uses the bf16 EUP on v6e/v7x; v5e/older lack it -> f32."""
    try:
        kind = jax.devices()[0].device_kind.lower()
        if ("v6" in kind) or ("v7" in kind) or ("7x" in kind):
            return jnp.bfloat16
    except Exception:
        pass
    return jnp.float32


# ---------------------------------------------------------------------------
# Tiled linear kernel:  y = x @ w_t + b   (w_t pre-transposed, bf16)
# ---------------------------------------------------------------------------

def _linear_kernel(x_ref, w_ref, b_ref, o_ref, acc_ref):
    kk = pl.program_id(2)

    @pl.when(kk == 0)
    def _():
        acc_ref[...] = jnp.zeros_like(acc_ref)

    acc_ref[...] += jnp.dot(
        x_ref[...].astype(jnp.bfloat16), w_ref[...],
        preferred_element_type=jnp.float32)

    @pl.when(kk == pl.num_programs(2) - 1)
    def _():
        o_ref[...] = (acc_ref[...] + b_ref[...]).astype(o_ref.dtype)


def pallas_linear(x, w_t, b, out_dtype=jnp.float32, tm=512, tn=512, tk=512):
    """y = x @ w_t + b.  x: (M, K) bf16, w_t: (K, N) bf16, b: (1, N) f32."""
    M, K = x.shape
    N = w_t.shape[1]
    tm = _pick_tile(M, tm, aligns=(128, 8))
    tn = _pick_tile(N, tn, aligns=(128,))
    tk = _pick_tile(K, tk, aligns=(128,))
    grid = (M // tm, N // tn, K // tk)
    return pl.pallas_call(
        _linear_kernel,
        out_shape=jax.ShapeDtypeStruct((M, N), out_dtype),
        grid_spec=pltpu.PrefetchScalarGridSpec(
            num_scalar_prefetch=0, grid=grid,
            in_specs=[
                pl.BlockSpec((tm, tk), lambda i, j, kk: (i, kk)),
                pl.BlockSpec((tk, tn), lambda i, j, kk: (kk, j)),
                pl.BlockSpec((1, tn), lambda i, j, kk: (0, j)),
            ],
            out_specs=pl.BlockSpec((tm, tn), lambda i, j, kk: (i, j)),
            scratch_shapes=[pltpu.VMEM((tm, tn), jnp.float32)]),
        compiler_params=pltpu.CompilerParams(
            dimension_semantics=("parallel", "parallel", "arbitrary"),
            vmem_limit_bytes=32 * 1024 * 1024),
    )(x, w_t, b)


# ---------------------------------------------------------------------------
# Fused K/V projection: shares the x tile DMA between the two matmuls
# ---------------------------------------------------------------------------

def _kv_proj_kernel(x_ref, wk_ref, wv_ref, bk_ref, bv_ref,
                    k_out, v_out, acck_ref, accv_ref):
    kk = pl.program_id(2)

    @pl.when(kk == 0)
    def _():
        acck_ref[...] = jnp.zeros_like(acck_ref)
        accv_ref[...] = jnp.zeros_like(accv_ref)

    x = x_ref[...].astype(jnp.bfloat16)
    acck_ref[...] += jnp.dot(x, wk_ref[...], preferred_element_type=jnp.float32)
    accv_ref[...] += jnp.dot(x, wv_ref[...], preferred_element_type=jnp.float32)

    @pl.when(kk == pl.num_programs(2) - 1)
    def _():
        k_out[...] = (acck_ref[...] + bk_ref[...]).astype(k_out.dtype)
        v_out[...] = (accv_ref[...] + bv_ref[...]).astype(v_out.dtype)


def pallas_kv_proj(x, wk_t, wv_t, bk, bv, tm=512, tn=512, tk=512):
    M, K = x.shape
    N = wk_t.shape[1]
    tm = _pick_tile(M, tm, aligns=(128, 8))
    tn = _pick_tile(N, tn, aligns=(128,))
    tk = _pick_tile(K, tk, aligns=(128,))
    grid = (M // tm, N // tn, K // tk)
    return pl.pallas_call(
        _kv_proj_kernel,
        out_shape=(jax.ShapeDtypeStruct((M, N), jnp.bfloat16),
                   jax.ShapeDtypeStruct((M, N), jnp.bfloat16)),
        grid_spec=pltpu.PrefetchScalarGridSpec(
            num_scalar_prefetch=0, grid=grid,
            in_specs=[
                pl.BlockSpec((tm, tk), lambda i, j, kk: (i, kk)),
                pl.BlockSpec((tk, tn), lambda i, j, kk: (kk, j)),
                pl.BlockSpec((tk, tn), lambda i, j, kk: (kk, j)),
                pl.BlockSpec((1, tn), lambda i, j, kk: (0, j)),
                pl.BlockSpec((1, tn), lambda i, j, kk: (0, j)),
            ],
            out_specs=[
                pl.BlockSpec((tm, tn), lambda i, j, kk: (i, j)),
                pl.BlockSpec((tm, tn), lambda i, j, kk: (i, j)),
            ],
            scratch_shapes=[pltpu.VMEM((tm, tn), jnp.float32),
                            pltpu.VMEM((tm, tn), jnp.float32)]),
        compiler_params=pltpu.CompilerParams(
            dimension_semantics=("parallel", "parallel", "arbitrary"),
            vmem_limit_bytes=32 * 1024 * 1024),
    )(x, wk_t, wv_t, bk, bv)


# ---------------------------------------------------------------------------
# Flash-style multi-head attention, heads kept concatenated on the lane axis
# ---------------------------------------------------------------------------

def _attn_kernel(q_ref, k_ref, v_ref, o_ref, m_ref, l_ref, acc_ref,
                 *, num_heads, head_dim, lane_aligned, exp_dtype):
    kc = pl.program_id(2)

    @pl.when(kc == 0)
    def _():
        m_ref[...] = jnp.full_like(m_ref, -jnp.inf)
        l_ref[...] = jnp.zeros_like(l_ref)
        acc_ref[...] = jnp.zeros_like(acc_ref)

    # m/l are (tq, num_heads) f32: tiny, so read/write the whole matrix.
    m_all = m_ref[...]
    l_all = l_ref[...]

    if not lane_aligned:
        # Fallback for head_dim % 128 != 0: whole-tile value loads (known-good
        # path for small / unaligned hidden sizes).
        q_full = q_ref[0]
        k_full = k_ref[0]
        v_full = v_ref[0]
        acc_full = acc_ref[...]
        acc_parts = []

    m_cols, l_cols = [], []

    for h in range(num_heads):            # unrolled Python loop over heads
        lo, hi = h * head_dim, (h + 1) * head_dim
        if lane_aligned:
            # Lane-aligned ref slices: load only the columns this head uses.
            q_h = q_ref[0, :, lo:hi]      # (tq,  D) bf16
            k_h = k_ref[0, :, lo:hi]      # (tkv, D) bf16
            v_h = v_ref[0, :, lo:hi]      # (tkv, D) bf16
            acc_h = acc_ref[:, lo:hi]     # (tq,  D) f32
        else:
            q_h = q_full[:, lo:hi]
            k_h = k_full[:, lo:hi]
            v_h = v_full[:, lo:hi]
            acc_h = acc_full[:, lo:hi]

        # scores = q_h @ k_h^T (contract head_dim of both; no transpose op).
        # 1/sqrt(D) scale is pre-folded into wq/bq.
        s = jax.lax.dot_general(
            q_h, k_h, (((1,), (1,)), ((), ())),
            preferred_element_type=jnp.float32)            # (tq, tkv) f32

        m_prev = m_all[:, h:h + 1]                         # (tq, 1) f32
        m_new = jnp.maximum(m_prev, jnp.max(s, axis=-1, keepdims=True))
        alpha = jnp.exp(m_prev - m_new)                    # (tq, 1), f32
        # Bulk exponentials in exp_dtype (bf16 on v6e/v7x -> bf16 EUP path).
        p = jnp.exp((s - m_new).astype(exp_dtype))         # (tq, tkv)
        l_new = alpha * l_all[:, h:h + 1] + jnp.sum(
            p.astype(jnp.float32), axis=-1, keepdims=True)
        acc_new = alpha * acc_h + jnp.dot(
            p.astype(v_h.dtype), v_h, preferred_element_type=jnp.float32)

        m_cols.append(m_new)
        l_cols.append(l_new)
        if lane_aligned:
            acc_ref[:, lo:hi] = acc_new
        else:
            acc_parts.append(acc_new)

    m_ref[...] = jnp.concatenate(m_cols, axis=1)
    l_ref[...] = jnp.concatenate(l_cols, axis=1)
    if not lane_aligned:
        acc_ref[...] = jnp.concatenate(acc_parts, axis=1)

    @pl.when(kc == pl.num_programs(2) - 1)
    def _():
        l_fin = l_ref[...]                                 # (tq, num_heads)
        if lane_aligned:
            # Per-head lane-aligned stores: no (tq, H) concatenate temp.
            for h in range(num_heads):
                lo, hi = h * head_dim, (h + 1) * head_dim
                inv_l = pl.reciprocal(l_fin[:, h:h + 1], approx=True)  # EUP
                o_ref[0, :, lo:hi] = (acc_ref[:, lo:hi] * inv_l
                                      ).astype(o_ref.dtype)
        else:
            acc_fin = acc_ref[...]
            parts = []
            for h in range(num_heads):
                lo, hi = h * head_dim, (h + 1) * head_dim
                inv_l = pl.reciprocal(l_fin[:, h:h + 1], approx=True)
                parts.append(acc_fin[:, lo:hi] * inv_l)
            o_ref[0] = jnp.concatenate(parts, axis=-1).astype(o_ref.dtype)


def pallas_attention(q, k, v, num_heads, tq_target=256, tkv_target=512,
                     exp_dtype=jnp.bfloat16):
    """q: (B, Sq, H) bf16, k/v: (B, Skv, H) bf16 -> (B, Sq, H) bf16."""
    B, Sq, H = q.shape
    _, Skv, _ = k.shape
    head_dim = H // num_heads
    tq = _pick_tile(Sq, tq_target, aligns=(128, 8))
    tkv = _pick_tile(Skv, tkv_target, aligns=(128, 8))

    # Explicit VMEM budget (v7x: 64 MiB physical / 32 MiB scoped default):
    # double-buffered q/k/v/o blocks + f32 acc + m/l must fit ~26 MiB.
    def vmem_est(tq_, tkv_):
        qo = 2 * (2 * tq_ * H * 2)          # q + o blocks, 2-deep, bf16
        kv = 2 * (2 * tkv_ * H * 2)         # k + v blocks, 2-deep, bf16
        acc = tq_ * H * 4                   # f32 accumulator
        ml = 2 * tq_ * max(num_heads, 128) * 4
        return qo + kv + acc + ml

    budget = 26 * 1024 * 1024
    for _ in range(8):
        if vmem_est(tq, tkv) <= budget:
            break
        new_tkv = _pick_tile(Skv, max(tkv // 2, 128), aligns=(128, 8))
        if new_tkv < tkv:
            tkv = new_tkv
            continue
        new_tq = _pick_tile(Sq, max(tq // 2, 128), aligns=(128, 8))
        if new_tq < tq:
            tq = new_tq
            continue
        break

    grid = (B, Sq // tq, Skv // tkv)
    kern = functools.partial(
        _attn_kernel, num_heads=num_heads, head_dim=head_dim,
        lane_aligned=(head_dim % 128 == 0), exp_dtype=exp_dtype)
    return pl.pallas_call(
        kern,
        out_shape=jax.ShapeDtypeStruct((B, Sq, H), jnp.bfloat16),
        grid_spec=pltpu.PrefetchScalarGridSpec(
            num_scalar_prefetch=0, grid=grid,
            in_specs=[
                pl.BlockSpec((1, tq, H), lambda b, qi, kc: (b, qi, 0)),
                pl.BlockSpec((1, tkv, H), lambda b, qi, kc: (b, kc, 0)),
                pl.BlockSpec((1, tkv, H), lambda b, qi, kc: (b, kc, 0)),
            ],
            out_specs=pl.BlockSpec((1, tq, H), lambda b, qi, kc: (b, qi, 0)),
            scratch_shapes=[
                pltpu.VMEM((tq, num_heads), jnp.float32),   # m (running max)
                pltpu.VMEM((tq, num_heads), jnp.float32),   # l (running sum)
                pltpu.VMEM((tq, H), jnp.float32),           # acc (lane-dense)
            ]),
        compiler_params=pltpu.CompilerParams(
            dimension_semantics=("parallel", "parallel", "arbitrary"),
            vmem_limit_bytes=32 * 1024 * 1024),
    )(q, k, v)


# ---------------------------------------------------------------------------
# Parameter setup & module-equivalent forward
# ---------------------------------------------------------------------------

def init_params(key, hidden_size):
    """nn.Linear-style init: U(-1/sqrt(in), 1/sqrt(in)); raw [out,in] f32."""
    bound = 1.0 / math.sqrt(hidden_size)
    keys = jax.random.split(key, 8)

    def u(k, shape):
        return jax.random.uniform(k, shape, jnp.float32, -bound, bound)

    return {
        "wq": u(keys[0], (hidden_size, hidden_size)), "bq": u(keys[1], (hidden_size,)),
        "wk": u(keys[2], (hidden_size, hidden_size)), "bk": u(keys[3], (hidden_size,)),
        "wv": u(keys[4], (hidden_size, hidden_size)), "bv": u(keys[5], (hidden_size,)),
        "wo": u(keys[6], (hidden_size, hidden_size)), "bo": u(keys[7], (hidden_size,)),
    }


def prepare_params(raw, num_heads):
    """One-time setup: pre-transpose + bf16-cast weights, fold q scale."""
    H = raw["wq"].shape[0]
    head_dim = H // num_heads
    scale = 1.0 / math.sqrt(head_dim)
    return {
        "wq_t": (raw["wq"] * scale).T.astype(jnp.bfloat16),
        "bq": (raw["bq"] * scale).reshape(1, H).astype(jnp.float32),
        "wk_t": raw["wk"].T.astype(jnp.bfloat16),
        "bk": raw["bk"].reshape(1, H).astype(jnp.float32),
        "wv_t": raw["wv"].T.astype(jnp.bfloat16),
        "bv": raw["bv"].reshape(1, H).astype(jnp.float32),
        "wo_t": raw["wo"].T.astype(jnp.bfloat16),
        "bo": raw["bo"].reshape(1, H).astype(jnp.float32),
    }


def ring_cross_attention_forward(kparams, query_states, key_value_states,
                                 num_heads):
    B, Sq, H = query_states.shape
    _, Skv, _ = key_value_states.shape

    # Pre-cast activations to bf16 once: halves the repeatedly re-fetched
    # x-tile HBM traffic inside the projections (bf16 compute path anyway).
    xq = query_states.reshape(B * Sq, H).astype(jnp.bfloat16)
    xkv = key_value_states.reshape(B * Skv, H).astype(jnp.bfloat16)

    # Projections (scale folded into wq/bq; K and V fused, sharing x DMA).
    q = pallas_linear(xq, kparams["wq_t"], kparams["bq"],
                      out_dtype=jnp.bfloat16)
    k, v = pallas_kv_proj(xkv, kparams["wk_t"], kparams["wv_t"],
                          kparams["bk"], kparams["bv"])

    # Free (metadata-only) reshapes back to [B, S, H]; heads stay on the lane
    # axis, so no HLO transpose passes over the activations.
    q = q.reshape(B, Sq, H)
    k = k.reshape(B, Skv, H)
    v = v.reshape(B, Skv, H)

    # Flash-style attention, all heads of one batch per grid step.
    o = pallas_attention(q, k, v, num_heads,
                         exp_dtype=_default_exp_dtype())   # (B, Sq, H) bf16

    # Output projection -> f32 result.
    out = pallas_linear(o.reshape(B * Sq, H), kparams["wo_t"], kparams["bo"],
                        out_dtype=jnp.float32)
    return out.reshape(B, Sq, H)


def _reference_forward(raw, query_states, key_value_states, num_heads):
    """Pure-JAX f32 reference for correctness checking."""
    B, Sq, H = query_states.shape
    _, Skv, _ = key_value_states.shape
    D = H // num_heads
    scale = 1.0 / math.sqrt(D)
    q = query_states @ raw["wq"].T + raw["bq"]
    k = key_value_states @ raw["wk"].T + raw["bk"]
    v = key_value_states @ raw["wv"].T + raw["bv"]
    q = q.reshape(B, Sq, num_heads, D).transpose(0, 2, 1, 3) * scale
    k = k.reshape(B, Skv, num_heads, D).transpose(0, 2, 1, 3)
    v = v.reshape(B, Skv, num_heads, D).transpose(0, 2, 1, 3)
    s = jnp.einsum("bhqd,bhkd->bhqk", q, k)
    p = jax.nn.softmax(s, axis=-1)
    o = jnp.einsum("bhqk,bhkd->bhqd", p, v)
    o = o.transpose(0, 2, 1, 3).reshape(B, Sq, H)
    return o @ raw["wo"].T + raw["bo"]


if __name__ == "__main__":
    def run_case(hidden_size, num_heads, B, Sq, Skv, seed):
        key = jax.random.PRNGKey(seed)
        k_params, k_q, k_kv = jax.random.split(key, 3)
        raw = init_params(k_params, hidden_size)
        kparams = prepare_params(raw, num_heads)
        q_states = jax.random.normal(k_q, (B, Sq, hidden_size), jnp.float32)
        kv_states = jax.random.normal(k_kv, (B, Skv, hidden_size), jnp.float32)

        forward = jax.jit(ring_cross_attention_forward, static_argnums=(3,))
        out = jax.block_until_ready(forward(kparams, q_states, kv_states,
                                            num_heads))
        ref = _reference_forward(raw, q_states, kv_states, num_heads)
        assert out.shape == (B, Sq, hidden_size)
        # bf16-in / f32-accumulate MXU path (+ approx reciprocal, bf16 exp on
        # v6e/v7x) vs pure-f32 reference -> loose tolerance.
        assert jnp.allclose(out, ref, atol=5e-2, rtol=5e-2), (
            f"mismatch vs reference (hidden={hidden_size}, heads={num_heads})")

    # Lane-aligned path (head_dim = 128): per-head ref slicing, direct stores.
    run_case(hidden_size=256, num_heads=2, B=2, Sq=8, Skv=16, seed=0)
    # Small / unaligned path (head_dim = 8): whole-tile value fallback.
    run_case(hidden_size=32, num_heads=4, B=2, Sq=8, Skv=16, seed=1)

    print("KERNEL_OK")
</pallas_src>

<mosaic_0001>
module attributes {stable_mosaic.version = 11 : i64} {
  func.func @_linear_kernel(%arg0: i32, %arg1: i32, %arg2: i32, %arg3: memref<16x256xbf16, #tpu.memory_space<vmem>>, %arg4: memref<256x256xbf16, #tpu.memory_space<vmem>>, %arg5: memref<1x256xf32, #tpu.memory_space<vmem>>, %arg6: memref<16x256xbf16, #tpu.memory_space<vmem>>, %arg7: memref<16x256xf32, #tpu.memory_space<vmem>>) attributes {dimension_semantics = [#tpu.dimension_semantics<parallel>, #tpu.dimension_semantics<parallel>, #tpu.dimension_semantics<arbitrary>], iteration_bounds = array<i64: 1, 1, 1>, scalar_prefetch = 0 : i64, scratch_operands = 1 : i64, tpu.core_type = #tpu.core_type<tc>, window_params = [{transform_indices = @transform_0, window_bounds = array<i64: 16, 256>}, {transform_indices = @transform_1, window_bounds = array<i64: 256, 256>}, {transform_indices = @transform_2, window_bounds = array<i64: 1, 256>}, {transform_indices = @transform_3, window_bounds = array<i64: 16, 256>}]} {
    %c0_i32 = arith.constant 0 : i32
    %0 = arith.cmpi eq, %arg2, %c0_i32 : i32
    %1 = arith.extui %0 : i1 to i32
    %c0_i32_0 = arith.constant 0 : i32
    %2 = arith.cmpi ne, %1, %c0_i32_0 : i32
    scf.if %2 {
      %cst_10 = arith.constant 0.000000e+00 : f32
      %12 = vector.broadcast %cst_10 : f32 to vector<16x256xf32>
      %c0_11 = arith.constant 0 : index
      %c0_12 = arith.constant 0 : index
      %13 = vector.load %arg7[%c0_11, %c0_12] : memref<16x256xf32, #tpu.memory_space<vmem>>, vector<16x256xf32>
      tpu.vector_store %arg7[%c0_11, %c0_12], %12 {strides = array<i32>} : memref<16x256xf32, #tpu.memory_space<vmem>>, vector<16x256xf32>,
    } else {
    }
    %c0 = arith.constant 0 : index
    %c0_1 = arith.constant 0 : index
    %3 = vector.load %arg7[%c0, %c0_1] : memref<16x256xf32, #tpu.memory_space<vmem>>, vector<16x256xf32>
    %c0_2 = arith.constant 0 : index
    %c0_3 = arith.constant 0 : index
    %4 = vector.load %arg3[%c0_2, %c0_3] : memref<16x256xbf16, #tpu.memory_space<vmem>>, vector<16x256xbf16>
    %c0_4 = arith.constant 0 : index
    %c0_5 = arith.constant 0 : index
    %5 = vector.load %arg4[%c0_4, %c0_5] : memref<256x256xbf16, #tpu.memory_space<vmem>>, vector<256x256xbf16>
    %cst = arith.constant dense<0.000000e+00> : vector<16x256xf32>
    %6 = tpu.matmul %4, %5, %cst {dimension_numbers = #tpu.dot_dimension_numbers<[1], [0], [0], [1], [0, 0, 1, 1], [], []>} : vector<16x256xbf16>, vector<256x256xbf16>, vector<16x256xf32> -> vector<16x256xf32>
    %7 = arith.addf %3, %6 : vector<16x256xf32>
    %c0_6 = arith.constant 0 : index
    %c0_7 = arith.constant 0 : index
    %8 = vector.load %arg7[%c0_6, %c0_7] : memref<16x256xf32, #tpu.memory_space<vmem>>, vector<16x256xf32>
    tpu.vector_store %arg7[%c0_6, %c0_7], %7 {strides = array<i32>} : memref<16x256xf32, #tpu.memory_space<vmem>>, vector<16x256xf32>,
    %c0_i32_8 = arith.constant 0 : i32
    %9 = arith.cmpi eq, %arg2, %c0_i32_8 : i32
    %10 = arith.extui %9 : i1 to i32
    %c0_i32_9 = arith.constant 0 : i32
    %11 = arith.cmpi ne, %10, %c0_i32_9 : i32
    scf.if %11 {
      %c0_10 = arith.constant 0 : index
      %c0_11 = arith.constant 0 : index
      %12 = vector.load %arg7[%c0_10, %c0_11] : memref<16x256xf32, #tpu.memory_space<vmem>>, vector<16x256xf32>
      %c0_12 = arith.constant 0 : index
      %c0_13 = arith.constant 0 : index
      %13 = vector.load %arg5[%c0_12, %c0_13] : memref<1x256xf32, #tpu.memory_space<vmem>>, vector<1x256xf32>
      %14 = vector.broadcast %13 : vector<1x256xf32> to vector<16x256xf32>
      %15 = arith.addf %12, %14 : vector<16x256xf32>
      %16 = arith.truncf %15 : vector<16x256xf32> to vector<16x256xbf16>
      %c0_14 = arith.constant 0 : index
      %c0_15 = arith.constant 0 : index
      %17 = vector.load %arg6[%c0_14, %c0_15] : memref<16x256xbf16, #tpu.memory_space<vmem>>, vector<16x256xbf16>
      tpu.vector_store %arg6[%c0_14, %c0_15], %16 {strides = array<i32>} : memref<16x256xbf16, #tpu.memory_space<vmem>>, vector<16x256xbf16>,
    } else {
    }
    return
  }
  func.func @transform_0(%arg0: i32, %arg1: i32, %arg2: i32) -> (i32, i32) {
    %c0_i32 = arith.constant 0 : i32
    return %arg0, %arg2 : i32, i32
  }
  func.func @transform_1(%arg0: i32, %arg1: i32, %arg2: i32) -> (i32, i32) {
    %c0_i32 = arith.constant 0 : i32
    return %arg2, %arg1 : i32, i32
  }
  func.func @transform_2(%arg0: i32, %arg1: i32, %arg2: i32) -> (i32, i32) {
    %c0_i32 = arith.constant 0 : i32
    %c0_i32_0 = arith.constant 0 : i32
    return %c0_i32, %arg1 : i32, i32
  }
  func.func @transform_3(%arg0: i32, %arg1: i32, %arg2: i32) -> (i32, i32) {
    %c0_i32 = arith.constant 0 : i32
    return %arg0, %arg1 : i32, i32
  }
}

module attributes {stable_mosaic.version = 11 : i64} {
  func.func @_kv_proj_kernel(%arg0: i32, %arg1: i32, %arg2: i32, %arg3: memref<32x256xbf16, #tpu.memory_space<vmem>>, %arg4: memref<256x256xbf16, #tpu.memory_space<vmem>>, %arg5: memref<256x256xbf16, #tpu.memory_space<vmem>>, %arg6: memref<1x256xf32, #tpu.memory_space<vmem>>, %arg7: memref<1x256xf32, #tpu.memory_space<vmem>>, %arg8: memref<32x256xbf16, #tpu.memory_space<vmem>>, %arg9: memref<32x256xbf16, #tpu.memory_space<vmem>>, %arg10: memref<32x256xf32, #tpu.memory_space<vmem>>, %arg11: memref<32x256xf32, #tpu.memory_space<vmem>>) attributes {dimension_semantics = [#tpu.dimension_semantics<parallel>, #tpu.dimension_semantics<parallel>, #tpu.dimension_semantics<arbitrary>], iteration_bounds = array<i64: 1, 1, 1>, scalar_prefetch = 0 : i64, scratch_operands = 2 : i64, tpu.core_type = #tpu.core_type<tc>, window_params = [{transform_indices = @transform_0, window_bounds = array<i64: 32, 256>}, {transform_indices = @transform_1, window_bounds = array<i64: 256, 256>}, {transform_indices = @transform_2, window_bounds = array<i64: 256, 256>}, {transform_indices = @transform_3, window_bounds = array<i64: 1, 256>}, {transform_indices = @transform_4, window_bounds = array<i64: 1, 256>}, {transform_indices = @transform_5, window_bounds = array<i64: 32, 256>}, {transform_indices = @transform_6, window_bounds = array<i64: 32, 256>}]} {
    %c0_i32 = arith.constant 0 : i32
    %0 = arith.cmpi eq, %arg2, %c0_i32 : i32
    %1 = arith.extui %0 : i1 to i32
    %c0_i32_0 = arith.constant 0 : i32
    %2 = arith.cmpi ne, %1, %c0_i32_0 : i32
    scf.if %2 {
      %cst_17 = arith.constant 0.000000e+00 : f32
      %17 = vector.broadcast %cst_17 : f32 to vector<32x256xf32>
      %c0_18 = arith.constant 0 : index
      %c0_19 = arith.constant 0 : index
      %18 = vector.load %arg10[%c0_18, %c0_19] : memref<32x256xf32, #tpu.memory_space<vmem>>, vector<32x256xf32>
      tpu.vector_store %arg10[%c0_18, %c0_19], %17 {strides = array<i32>} : memref<32x256xf32, #tpu.memory_space<vmem>>, vector<32x256xf32>,
      %cst_20 = arith.constant 0.000000e+00 : f32
      %19 = vector.broadcast %cst_20 : f32 to vector<32x256xf32>
      %c0_21 = arith.constant 0 : index
      %c0_22 = arith.constant 0 : index
      %20 = vector.load %arg11[%c0_21, %c0_22] : memref<32x256xf32, #tpu.memory_space<vmem>>, vector<32x256xf32>
      tpu.vector_store %arg11[%c0_21, %c0_22], %19 {strides = array<i32>} : memref<32x256xf32, #tpu.memory_space<vmem>>, vector<32x256xf32>,
    } else {
    }
    %c0 = arith.constant 0 : index
    %c0_1 = arith.constant 0 : index
    %3 = vector.load %arg3[%c0, %c0_1] : memref<32x256xbf16, #tpu.memory_space<vmem>>, vector<32x256xbf16>
    %c0_2 = arith.constant 0 : index
    %c0_3 = arith.constant 0 : index
    %4 = vector.load %arg10[%c0_2, %c0_3] : memref<32x256xf32, #tpu.memory_space<vmem>>, vector<32x256xf32>
    %c0_4 = arith.constant 0 : index
    %c0_5 = arith.constant 0 : index
    %5 = vector.load %arg4[%c0_4, %c0_5] : memref<256x256xbf16, #tpu.memory_space<vmem>>, vector<256x256xbf16>
    %cst = arith.constant dense<0.000000e+00> : vector<32x256xf32>
    %6 = tpu.matmul %3, %5, %cst {dimension_numbers = #tpu.dot_dimension_numbers<[1], [0], [0], [1], [0, 0, 1, 1], [], []>} : vector<32x256xbf16>, vector<256x256xbf16>, vector<32x256xf32> -> vector<32x256xf32>
    %7 = arith.addf %4, %6 : vector<32x256xf32>
    %c0_6 = arith.constant 0 : index
    %c0_7 = arith.constant 0 : index
    %8 = vector.load %arg10[%c0_6, %c0_7] : memref<32x256xf32, #tpu.memory_space<vmem>>, vector<32x256xf32>
    tpu.vector_store %arg10[%c0_6, %c0_7], %7 {strides = array<i32>} : memref<32x256xf32, #tpu.memory_space<vmem>>, vector<32x256xf32>,
    %c0_8 = arith.constant 0 : index
    %c0_9 = arith.constant 0 : index
    %9 = vector.load %arg11[%c0_8, %c0_9] : memref<32x256xf32, #tpu.memory_space<vmem>>, vector<32x256xf32>
    %c0_10 = arith.constant 0 : index
    %c0_11 = arith.constant 0 : index
    %10 = vector.load %arg5[%c0_10, %c0_11] : memref<256x256xbf16, #tpu.memory_space<vmem>>, vector<256x256xbf16>
    %cst_12 = arith.constant dense<0.000000e+00> : vector<32x256xf32>
    %11 = tpu.matmul %3, %10, %cst_12 {dimension_numbers = #tpu.dot_dimension_numbers<[1], [0], [0], [1], [0, 0, 1, 1], [], []>} : vector<32x256xbf16>, vector<256x256xbf16>, vector<32x256xf32> -> vector<32x256xf32>
    %12 = arith.addf %9, %11 : vector<32x256xf32>
    %c0_13 = arith.constant 0 : index
    %c0_14 = arith.constant 0 : index
    %13 = vector.load %arg11[%c0_13, %c0_14] : memref<32x256xf32, #tpu.memory_space<vmem>>, vector<32x256xf32>
    tpu.vector_store %arg11[%c0_13, %c0_14], %12 {strides = array<i32>} : memref<32x256xf32, #tpu.memory_space<vmem>>, vector<32x256xf32>,
    %c0_i32_15 = arith.constant 0 : i32
    %14 = arith.cmpi eq, %arg2, %c0_i32_15 : i32
    %15 = arith.extui %14 : i1 to i32
    %c0_i32_16 = arith.constant 0 : i32
    %16 = arith.cmpi ne, %15, %c0_i32_16 : i32
    scf.if %16 {
      %c0_17 = arith.constant 0 : index
      %c0_18 = arith.constant 0 : index
      %17 = vector.load %arg10[%c0_17, %c0_18] : memref<32x256xf32, #tpu.memory_space<vmem>>, vector<32x256xf32>
      %c0_19 = arith.constant 0 : index
      %c0_20 = arith.constant 0 : index
      %18 = vector.load %arg6[%c0_19, %c0_20] : memref<1x256xf32, #tpu.memory_space<vmem>>, vector<1x256xf32>
      %19 = vector.broadcast %18 : vector<1x256xf32> to vector<32x256xf32>
      %20 = arith.addf %17, %19 : vector<32x256xf32>
      %21 = arith.truncf %20 : vector<32x256xf32> to vector<32x256xbf16>
      %c0_21 = arith.constant 0 : index
      %c0_22 = arith.constant 0 : index
      %22 = vector.load %arg8[%c0_21, %c0_22] : memref<32x256xbf16, #tpu.memory_space<vmem>>, vector<32x256xbf16>
      tpu.vector_store %arg8[%c0_21, %c0_22], %21 {strides = array<i32>} : memref<32x256xbf16, #tpu.memory_space<vmem>>, vector<32x256xbf16>,
      %c0_23 = arith.constant 0 : index
      %c0_24 = arith.constant 0 : index
      %23 = vector.load %arg11[%c0_23, %c0_24] : memref<32x256xf32, #tpu.memory_space<vmem>>, vector<32x256xf32>
      %c0_25 = arith.constant 0 : index
      %c0_26 = arith.constant 0 : index
      %24 = vector.load %arg7[%c0_25, %c0_26] : memref<1x256xf32, #tpu.memory_space<vmem>>, vector<1x256xf32>
      %25 = vector.broadcast %24 : vector<1x256xf32> to vector<32x256xf32>
      %26 = arith.addf %23, %25 : vector<32x256xf32>
      %27 = arith.truncf %26 : vector<32x256xf32> to vector<32x256xbf16>
      %c0_27 = arith.constant 0 : index
      %c0_28 = arith.constant 0 : index
      %28 = vector.load %arg9[%c0_27, %c0_28] : memref<32x256xbf16, #tpu.memory_space<vmem>>, vector<32x256xbf16>
      tpu.vector_store %arg9[%c0_27, %c0_28], %27 {strides = array<i32>} : memref<32x256xbf16, #tpu.memory_space<vmem>>, vector<32x256xbf16>,
    } else {
    }
    return
  }
  func.func @transform_0(%arg0: i32, %arg1: i32, %arg2: i32) -> (i32, i32) {
    %c0_i32 = arith.constant 0 : i32
    return %arg0, %arg2 : i32, i32
  }
  func.func @transform_1(%arg0: i32, %arg1: i32, %arg2: i32) -> (i32, i32) {
    %c0_i32 = arith.constant 0 : i32
    return %arg2, %arg1 : i32, i32
  }
  func.func @transform_2(%arg0: i32, %arg1: i32, %arg2: i32) -> (i32, i32) {
    %c0_i32 = arith.constant 0 : i32
    return %arg2, %arg1 : i32, i32
  }
  func.func @transform_3(%arg0: i32, %arg1: i32, %arg2: i32) -> (i32, i32) {
    %c0_i32 = arith.constant 0 : i32
    %c0_i32_0 = arith.constant 0 : i32
    return %c0_i32, %arg1 : i32, i32
  }
  func.func @transform_4(%arg0: i32, %arg1: i32, %arg2: i32) -> (i32, i32) {
    %c0_i32 = arith.constant 0 : i32
    %c0_i32_0 = arith.constant 0 : i32
    return %c0_i32, %arg1 : i32, i32
  }
  func.func @transform_5(%arg0: i32, %arg1: i32, %arg2: i32) -> (i32, i32) {
    %c0_i32 = arith.constant 0 : i32
    return %arg0, %arg1 : i32, i32
  }
  func.func @transform_6(%arg0: i32, %arg1: i32, %arg2: i32) -> (i32, i32) {
    %c0_i32 = arith.constant 0 : i32
    return %arg0, %arg1 : i32, i32
  }
}

module attributes {stable_mosaic.version = 11 : i64} {
  func.func @_attn_kernel(%arg0: i32, %arg1: i32, %arg2: i32, %arg3: memref<1x8x256xbf16, #tpu.memory_space<vmem>>, %arg4: memref<1x16x256xbf16, #tpu.memory_space<vmem>>, %arg5: memref<1x16x256xbf16, #tpu.memory_space<vmem>>, %arg6: memref<1x8x256xbf16, #tpu.memory_space<vmem>>, %arg7: memref<8x2xf32, #tpu.memory_space<vmem>>, %arg8: memref<8x2xf32, #tpu.memory_space<vmem>>, %arg9: memref<8x256xf32, #tpu.memory_space<vmem>>) attributes {dimension_semantics = [#tpu.dimension_semantics<parallel>, #tpu.dimension_semantics<parallel>, #tpu.dimension_semantics<arbitrary>], iteration_bounds = array<i64: 2, 1, 1>, scalar_prefetch = 0 : i64, scratch_operands = 3 : i64, tpu.core_type = #tpu.core_type<tc>, window_params = [{transform_indices = @transform_0, window_bounds = array<i64: 1, 8, 256>}, {transform_indices = @transform_1, window_bounds = array<i64: 1, 16, 256>}, {transform_indices = @transform_2, window_bounds = array<i64: 1, 16, 256>}, {transform_indices = @transform_3, window_bounds = array<i64: 1, 8, 256>}]} {
    %c0_i32 = arith.constant 0 : i32
    %0 = arith.cmpi eq, %arg2, %c0_i32 : i32
    %1 = arith.extui %0 : i1 to i32
    %c0_i32_0 = arith.constant 0 : i32
    %2 = arith.cmpi ne, %1, %c0_i32_0 : i32
    scf.if %2 {
      %cst_42 = arith.constant 0xFF800000 : f32
      %68 = vector.broadcast %cst_42 : f32 to vector<8x2xf32>
      %c0_43 = arith.constant 0 : index
      %c0_44 = arith.constant 0 : index
      %69 = vector.load %arg7[%c0_43, %c0_44] : memref<8x2xf32, #tpu.memory_space<vmem>>, vector<8x2xf32>
      tpu.vector_store %arg7[%c0_43, %c0_44], %68 {strides = array<i32>} : memref<8x2xf32, #tpu.memory_space<vmem>>, vector<8x2xf32>,
      %cst_45 = arith.constant 0.000000e+00 : f32
      %70 = vector.broadcast %cst_45 : f32 to vector<8x2xf32>
      %c0_46 = arith.constant 0 : index
      %c0_47 = arith.constant 0 : index
      %71 = vector.load %arg8[%c0_46, %c0_47] : memref<8x2xf32, #tpu.memory_space<vmem>>, vector<8x2xf32>
      tpu.vector_store %arg8[%c0_46, %c0_47], %70 {strides = array<i32>} : memref<8x2xf32, #tpu.memory_space<vmem>>, vector<8x2xf32>,
      %cst_48 = arith.constant 0.000000e+00 : f32
      %72 = vector.broadcast %cst_48 : f32 to vector<8x256xf32>
      %c0_49 = arith.constant 0 : index
      %c0_50 = arith.constant 0 : index
      %73 = vector.load %arg9[%c0_49, %c0_50] : memref<8x256xf32, #tpu.memory_space<vmem>>, vector<8x256xf32>
      tpu.vector_store %arg9[%c0_49, %c0_50], %72 {strides = array<i32>} : memref<8x256xf32, #tpu.memory_space<vmem>>, vector<8x256xf32>,
    } else {
    }
    %c0 = arith.constant 0 : index
    %c0_1 = arith.constant 0 : index
    %3 = vector.load %arg7[%c0, %c0_1] : memref<8x2xf32, #tpu.memory_space<vmem>>, vector<8x2xf32>
    %c0_2 = arith.constant 0 : index
    %c0_3 = arith.constant 0 : index
    %4 = vector.load %arg8[%c0_2, %c0_3] : memref<8x2xf32, #tpu.memory_space<vmem>>, vector<8x2xf32>
    %c0_4 = arith.constant 0 : index
    %c0_5 = arith.constant 0 : index
    %c0_6 = arith.constant 0 : index
    %5 = vector.load %arg3[%c0_4, %c0_5, %c0_6] : memref<1x8x256xbf16, #tpu.memory_space<vmem>>, vector<1x8x128xbf16>
    %6 = vector.shape_cast %5 : vector<1x8x128xbf16> to vector<8x128xbf16>
    %c0_7 = arith.constant 0 : index
    %c0_8 = arith.constant 0 : index
    %c0_9 = arith.constant 0 : index
    %7 = vector.load %arg4[%c0_7, %c0_8, %c0_9] : memref<1x16x256xbf16, #tpu.memory_space<vmem>>, vector<1x16x128xbf16>
    %8 = vector.shape_cast %7 : vector<1x16x128xbf16> to vector<16x128xbf16>
    %c0_10 = arith.constant 0 : index
    %c0_11 = arith.constant 0 : index
    %c0_12 = arith.constant 0 : index
    %9 = vector.load %arg5[%c0_10, %c0_11, %c0_12] : memref<1x16x256xbf16, #tpu.memory_space<vmem>>, vector<1x16x128xbf16>
    %10 = vector.shape_cast %9 : vector<1x16x128xbf16> to vector<16x128xbf16>
    %c0_13 = arith.constant 0 : index
    %c0_14 = arith.constant 0 : index
    %11 = vector.load %arg9[%c0_13, %c0_14] : memref<8x256xf32, #tpu.memory_space<vmem>>, vector<8x128xf32>
    %cst = arith.constant dense<0.000000e+00> : vector<8x16xf32>
    %12 = tpu.matmul %6, %8, %cst {dimension_numbers = #tpu.dot_dimension_numbers<[1], [1], [0], [0], [0, 0, 1, 0], [], []>} : vector<8x128xbf16>, vector<16x128xbf16>, vector<8x16xf32> -> vector<8x16xf32>
    %13 = vector.extract_strided_slice %3 {offsets = [0, 0], sizes = [8, 1], strides = [1, 1]} : vector<8x2xf32> to vector<8x1xf32>
    %cst_15 = arith.constant dense<0xFF800000> : vector<8xf32>
    %14 = vector.multi_reduction <maximumf>, %12, %cst_15 [1] : vector<8x16xf32> to vector<8xf32>
    %15 = vector.shape_cast %14 : vector<8xf32> to vector<8x1xf32>
    %16 = arith.maximumf %13, %15 : vector<8x1xf32>
    %17 = arith.subf %13, %16 : vector<8x1xf32>
    %18 = math.exp %17 : vector<8x1xf32>
    %19 = vector.broadcast %16 : vector<8x1xf32> to vector<8x16xf32>
    %20 = arith.subf %12, %19 : vector<8x16xf32>
    %21 = math.exp %20 : vector<8x16xf32>
    %22 = vector.extract_strided_slice %4 {offsets = [0, 0], sizes = [8, 1], strides = [1, 1]} : vector<8x2xf32> to vector<8x1xf32>
    %23 = arith.mulf %18, %22 : vector<8x1xf32>
    %cst_16 = arith.constant dense<0.000000e+00> : vector<8xf32>
    %24 = vector.multi_reduction <add>, %21, %cst_16 [1] : vector<8x16xf32> to vector<8xf32>
    %25 = vector.shape_cast %24 : vector<8xf32> to vector<8x1xf32>
    %26 = arith.addf %23, %25 : vector<8x1xf32>
    %27 = vector.broadcast %18 : vector<8x1xf32> to vector<8x128xf32>
    %28 = arith.mulf %27, %11 : vector<8x128xf32>
    %29 = arith.truncf %21 : vector<8x16xf32> to vector<8x16xbf16>
    %cst_17 = arith.constant dense<0.000000e+00> : vector<8x128xf32>
    %30 = tpu.matmul %29, %10, %cst_17 {dimension_numbers = #tpu.dot_dimension_numbers<[1], [0], [0], [1], [0, 0, 1, 1], [], []>} : vector<8x16xbf16>, vector<16x128xbf16>, vector<8x128xf32> -> vector<8x128xf32>
    %31 = arith.addf %28, %30 : vector<8x128xf32>
    %c0_18 = arith.constant 0 : index
    %c0_19 = arith.constant 0 : index
    %32 = vector.load %arg9[%c0_18, %c0_19] : memref<8x256xf32, #tpu.memory_space<vmem>>, vector<8x128xf32>
    tpu.vector_store %arg9[%c0_18, %c0_19], %31 {strides = array<i32>} : memref<8x256xf32, #tpu.memory_space<vmem>>, vector<8x128xf32>,
    %c0_20 = arith.constant 0 : index
    %c0_21 = arith.constant 0 : index
    %c128 = arith.constant 128 : index
    %33 = vector.load %arg3[%c0_20, %c0_21, %c128] : memref<1x8x256xbf16, #tpu.memory_space<vmem>>, vector<1x8x128xbf16>
    %34 = vector.shape_cast %33 : vector<1x8x128xbf16> to vector<8x128xbf16>
    %c0_22 = arith.constant 0 : index
    %c0_23 = arith.constant 0 : index
    %c128_24 = arith.constant 128 : index
    %35 = vector.load %arg4[%c0_22, %c0_23, %c128_24] : memref<1x16x256xbf16, #tpu.memory_space<vmem>>, vector<1x16x128xbf16>
    %36 = vector.shape_cast %35 : vector<1x16x128xbf16> to vector<16x128xbf16>
    %c0_25 = arith.constant 0 : index
    %c0_26 = arith.constant 0 : index
    %c128_27 = arith.constant 128 : index
    %37 = vector.load %arg5[%c0_25, %c0_26, %c128_27] : memref<1x16x256xbf16, #tpu.memory_space<vmem>>, vector<1x16x128xbf16>
    %38 = vector.shape_cast %37 : vector<1x16x128xbf16> to vector<16x128xbf16>
    %c0_28 = arith.constant 0 : index
    %c128_29 = arith.constant 128 : index
    %39 = vector.load %arg9[%c0_28, %c128_29] : memref<8x256xf32, #tpu.memory_space<vmem>>, vector<8x128xf32>
    %cst_30 = arith.constant dense<0.000000e+00> : vector<8x16xf32>
    %40 = tpu.matmul %34, %36, %cst_30 {dimension_numbers = #tpu.dot_dimension_numbers<[1], [1], [0], [0], [0, 0, 1, 0], [], []>} : vector<8x128xbf16>, vector<16x128xbf16>, vector<8x16xf32> -> vector<8x16xf32>
    %41 = vector.extract_strided_slice %3 {offsets = [0, 1], sizes = [8, 1], strides = [1, 1]} : vector<8x2xf32> to vector<8x1xf32>
    %cst_31 = arith.constant dense<0xFF800000> : vector<8xf32>
    %42 = vector.multi_reduction <maximumf>, %40, %cst_31 [1] : vector<8x16xf32> to vector<8xf32>
    %43 = vector.shape_cast %42 : vector<8xf32> to vector<8x1xf32>
    %44 = arith.maximumf %41, %43 : vector<8x1xf32>
    %45 = arith.subf %41, %44 : vector<8x1xf32>
    %46 = math.exp %45 : vector<8x1xf32>
    %47 = vector.broadcast %44 : vector<8x1xf32> to vector<8x16xf32>
    %48 = arith.subf %40, %47 : vector<8x16xf32>
    %49 = math.exp %48 : vector<8x16xf32>
    %50 = vector.extract_strided_slice %4 {offsets = [0, 1], sizes = [8, 1], strides = [1, 1]} : vector<8x2xf32> to vector<8x1xf32>
    %51 = arith.mulf %46, %50 : vector<8x1xf32>
    %cst_32 = arith.constant dense<0.000000e+00> : vector<8xf32>
    %52 = vector.multi_reduction <add>, %49, %cst_32 [1] : vector<8x16xf32> to vector<8xf32>
    %53 = vector.shape_cast %52 : vector<8xf32> to vector<8x1xf32>
    %54 = arith.addf %51, %53 : vector<8x1xf32>
    %55 = vector.broadcast %46 : vector<8x1xf32> to vector<8x128xf32>
    %56 = arith.mulf %55, %39 : vector<8x128xf32>
    %57 = arith.truncf %49 : vector<8x16xf32> to vector<8x16xbf16>
    %cst_33 = arith.constant dense<0.000000e+00> : vector<8x128xf32>
    %58 = tpu.matmul %57, %38, %cst_33 {dimension_numbers = #tpu.dot_dimension_numbers<[1], [0], [0], [1], [0, 0, 1, 1], [], []>} : vector<8x16xbf16>, vector<16x128xbf16>, vector<8x128xf32> -> vector<8x128xf32>
    %59 = arith.addf %56, %58 : vector<8x128xf32>
    %c0_34 = arith.constant 0 : index
    %c128_35 = arith.constant 128 : index
    %60 = vector.load %arg9[%c0_34, %c128_35] : memref<8x256xf32, #tpu.memory_space<vmem>>, vector<8x128xf32>
    tpu.vector_store %arg9[%c0_34, %c128_35], %59 {strides = array<i32>} : memref<8x256xf32, #tpu.memory_space<vmem>>, vector<8x128xf32>,
    %61 = tpu.concatenate %16, %44 in 1 : vector<8x1xf32>, vector<8x1xf32> -> vector<8x2xf32>
    %c0_36 = arith.constant 0 : index
    %c0_37 = arith.constant 0 : index
    %62 = vector.load %arg7[%c0_36, %c0_37] : memref<8x2xf32, #tpu.memory_space<vmem>>, vector<8x2xf32>
    tpu.vector_store %arg7[%c0_36, %c0_37], %61 {strides = array<i32>} : memref<8x2xf32, #tpu.memory_space<vmem>>, vector<8x2xf32>,
    %63 = tpu.concatenate %26, %54 in 1 : vector<8x1xf32>, vector<8x1xf32> -> vector<8x2xf32>
    %c0_38 = arith.constant 0 : index
    %c0_39 = arith.constant 0 : index
    %64 = vector.load %arg8[%c0_38, %c0_39] : memref<8x2xf32, #tpu.memory_space<vmem>>, vector<8x2xf32>
    tpu.vector_store %arg8[%c0_38, %c0_39], %63 {strides = array<i32>} : memref<8x2xf32, #tpu.memory_space<vmem>>, vector<8x2xf32>,
    %c0_i32_40 = arith.constant 0 : i32
    %65 = arith.cmpi eq, %arg2, %c0_i32_40 : i32
    %66 = arith.extui %65 : i1 to i32
    %c0_i32_41 = arith.constant 0 : i32
    %67 = arith.cmpi ne, %66, %c0_i32_41 : i32
    scf.if %67 {
      %c0_42 = arith.constant 0 : index
      %c0_43 = arith.constant 0 : index
      %68 = vector.load %arg8[%c0_42, %c0_43] : memref<8x2xf32, #tpu.memory_space<vmem>>, vector<8x2xf32>
      %69 = vector.extract_strided_slice %68 {offsets = [0, 0], sizes = [8, 1], strides = [1, 1]} : vector<8x2xf32> to vector<8x1xf32>
      %70 = tpu.reciprocal %69 {approx = true} : vector<8x1xf32> -> vector<8x1xf32>
      %c0_44 = arith.constant 0 : index
      %c0_45 = arith.constant 0 : index
      %71 = vector.load %arg9[%c0_44, %c0_45] : memref<8x256xf32, #tpu.memory_space<vmem>>, vector<8x128xf32>
      %72 = vector.broadcast %70 : vector<8x1xf32> to vector<8x128xf32>
      %73 = arith.mulf %71, %72 : vector<8x128xf32>
      %74 = arith.truncf %73 : vector<8x128xf32> to vector<8x128xbf16>
      %c0_46 = arith.constant 0 : index
      %c0_47 = arith.constant 0 : index
      %c0_48 = arith.constant 0 : index
      %75 = vector.load %arg6[%c0_46, %c0_47, %c0_48] : memref<1x8x256xbf16, #tpu.memory_space<vmem>>, vector<1x8x128xbf16>
      %76 = vector.shape_cast %75 : vector<1x8x128xbf16> to vector<8x128xbf16>
      %77 = vector.shape_cast %74 : vector<8x128xbf16> to vector<1x8x128xbf16>
      tpu.vector_store %arg6[%c0_46, %c0_47, %c0_48], %77 {strides = array<i32>} : memref<1x8x256xbf16, #tpu.memory_space<vmem>>, vector<1x8x128xbf16>,
      %78 = vector.extract_strided_slice %68 {offsets = [0, 1], sizes = [8, 1], strides = [1, 1]} : vector<8x2xf32> to vector<8x1xf32>
      %79 = tpu.reciprocal %78 {approx = true} : vector<8x1xf32> -> vector<8x1xf32>
      %c0_49 = arith.constant 0 : index
      %c128_50 = arith.constant 128 : index
      %80 = vector.load %arg9[%c0_49, %c128_50] : memref<8x256xf32, #tpu.memory_space<vmem>>, vector<8x128xf32>
      %81 = vector.broadcast %79 : vector<8x1xf32> to vector<8x128xf32>
      %82 = arith.mulf %80, %81 : vector<8x128xf32>
      %83 = arith.truncf %82 : vector<8x128xf32> to vector<8x128xbf16>
      %c0_51 = arith.constant 0 : index
      %c0_52 = arith.constant 0 : index
      %c128_53 = arith.constant 128 : index
      %84 = vector.load %arg6[%c0_51, %c0_52, %c128_53] : memref<1x8x256xbf16, #tpu.memory_space<vmem>>, vector<1x8x128xbf16>
      %85 = vector.shape_cast %84 : vector<1x8x128xbf16> to vector<8x128xbf16>
      %86 = vector.shape_cast %83 : vector<8x128xbf16> to vector<1x8x128xbf16>
      tpu.vector_store %arg6[%c0_51, %c0_52, %c128_53], %86 {strides = array<i32>} : memref<1x8x256xbf16, #tpu.memory_space<vmem>>, vector<1x8x128xbf16>,
    } else {
    }
    return
  }
  func.func @transform_0(%arg0: i32, %arg1: i32, %arg2: i32) -> (i32, i32, i32) {
    %c0_i32 = arith.constant 0 : i32
    %c0_i32_0 = arith.constant 0 : i32
    return %arg0, %arg1, %c0_i32 : i32, i32, i32
  }
  func.func @transform_1(%arg0: i32, %arg1: i32, %arg2: i32) -> (i32, i32, i32) {
    %c0_i32 = arith.constant 0 : i32
    %c0_i32_0 = arith.constant 0 : i32
    return %arg0, %arg2, %c0_i32 : i32, i32, i32
  }
  func.func @transform_2(%arg0: i32, %arg1: i32, %arg2: i32) -> (i32, i32, i32) {
    %c0_i32 = arith.constant 0 : i32
    %c0_i32_0 = arith.constant 0 : i32
    return %arg0, %arg2, %c0_i32 : i32, i32, i32
  }
  func.func @transform_3(%arg0: i32, %arg1: i32, %arg2: i32) -> (i32, i32, i32) {
    %c0_i32 = arith.constant 0 : i32
    %c0_i32_0 = arith.constant 0 : i32
    return %arg0, %arg1, %c0_i32 : i32, i32, i32
  }
}

module attributes {stable_mosaic.version = 11 : i64} {
  func.func @_linear_kernel(%arg0: i32, %arg1: i32, %arg2: i32, %arg3: memref<16x256xbf16, #tpu.memory_space<vmem>>, %arg4: memref<256x256xbf16, #tpu.memory_space<vmem>>, %arg5: memref<1x256xf32, #tpu.memory_space<vmem>>, %arg6: memref<16x256xf32, #tpu.memory_space<vmem>>, %arg7: memref<16x256xf32, #tpu.memory_space<vmem>>) attributes {dimension_semantics = [#tpu.dimension_semantics<parallel>, #tpu.dimension_semantics<parallel>, #tpu.dimension_semantics<arbitrary>], iteration_bounds = array<i64: 1, 1, 1>, scalar_prefetch = 0 : i64, scratch_operands = 1 : i64, tpu.core_type = #tpu.core_type<tc>, window_params = [{transform_indices = @transform_0, window_bounds = array<i64: 16, 256>}, {transform_indices = @transform_1, window_bounds = array<i64: 256, 256>}, {transform_indices = @transform_2, window_bounds = array<i64: 1, 256>}, {transform_indices = @transform_3, window_bounds = array<i64: 16, 256>}]} {
    %c0_i32 = arith.constant 0 : i32
    %0 = arith.cmpi eq, %arg2, %c0_i32 : i32
    %1 = arith.extui %0 : i1 to i32
    %c0_i32_0 = arith.constant 0 : i32
    %2 = arith.cmpi ne, %1, %c0_i32_0 : i32
    scf.if %2 {
      %cst_10 = arith.constant 0.000000e+00 : f32
      %12 = vector.broadcast %cst_10 : f32 to vector<16x256xf32>
      %c0_11 = arith.constant 0 : index
      %c0_12 = arith.constant 0 : index
      %13 = vector.load %arg7[%c0_11, %c0_12] : memref<16x256xf32, #tpu.memory_space<vmem>>, vector<16x256xf32>
      tpu.vector_store %arg7[%c0_11, %c0_12], %12 {strides = array<i32>} : memref<16x256xf32, #tpu.memory_space<vmem>>, vector<16x256xf32>,
    } else {
    }
    %c0 = arith.constant 0 : index
    %c0_1 = arith.constant 0 : index
    %3 = vector.load %arg7[%c0, %c0_1] : memref<16x256xf32, #tpu.memory_space<vmem>>, vector<16x256xf32>
    %c0_2 = arith.constant 0 : index
    %c0_3 = arith.constant 0 : index
    %4 = vector.load %arg3[%c0_2, %c0_3] : memref<16x256xbf16, #tpu.memory_space<vmem>>, vector<16x256xbf16>
    %c0_4 = arith.constant 0 : index
    %c0_5 = arith.constant 0 : index
    %5 = vector.load %arg4[%c0_4, %c0_5] : memref<256x256xbf16, #tpu.memory_space<vmem>>, vector<256x256xbf16>
    %cst = arith.constant dense<0.000000e+00> : vector<16x256xf32>
    %6 = tpu.matmul %4, %5, %cst {dimension_numbers = #tpu.dot_dimension_numbers<[1], [0], [0], [1], [0, 0, 1, 1], [], []>} : vector<16x256xbf16>, vector<256x256xbf16>, vector<16x256xf32> -> vector<16x256xf32>
    %7 = arith.addf %3, %6 : vector<16x256xf32>
    %c0_6 = arith.constant 0 : index
    %c0_7 = arith.constant 0 : index
    %8 = vector.load %arg7[%c0_6, %c0_7] : memref<16x256xf32, #tpu.memory_space<vmem>>, vector<16x256xf32>
    tpu.vector_store %arg7[%c0_6, %c0_7], %7 {strides = array<i32>} : memref<16x256xf32, #tpu.memory_space<vmem>>, vector<16x256xf32>,
    %c0_i32_8 = arith.constant 0 : i32
    %9 = arith.cmpi eq, %arg2, %c0_i32_8 : i32
    %10 = arith.extui %9 : i1 to i32
    %c0_i32_9 = arith.constant 0 : i32
    %11 = arith.cmpi ne, %10, %c0_i32_9 : i32
    scf.if %11 {
      %c0_10 = arith.constant 0 : index
      %c0_11 = arith.constant 0 : index
      %12 = vector.load %arg7[%c0_10, %c0_11] : memref<16x256xf32, #tpu.memory_space<vmem>>, vector<16x256xf32>
      %c0_12 = arith.constant 0 : index
      %c0_13 = arith.constant 0 : index
      %13 = vector.load %arg5[%c0_12, %c0_13] : memref<1x256xf32, #tpu.memory_space<vmem>>, vector<1x256xf32>
      %14 = vector.broadcast %13 : vector<1x256xf32> to vector<16x256xf32>
      %15 = arith.addf %12, %14 : vector<16x256xf32>
      %c0_14 = arith.constant 0 : index
      %c0_15 = arith.constant 0 : index
      %16 = vector.load %arg6[%c0_14, %c0_15] : memref<16x256xf32, #tpu.memory_space<vmem>>, vector<16x256xf32>
      tpu.vector_store %arg6[%c0_14, %c0_15], %15 {strides = array<i32>} : memref<16x256xf32, #tpu.memory_space<vmem>>, vector<16x256xf32>,
    } else {
    }
    return
  }
  func.func @transform_0(%arg0: i32, %arg1: i32, %arg2: i32) -> (i32, i32) {
    %c0_i32 = arith.constant 0 : i32
    return %arg0, %arg2 : i32, i32
  }
  func.func @transform_1(%arg0: i32, %arg1: i32, %arg2: i32) -> (i32, i32) {
    %c0_i32 = arith.constant 0 : i32
    return %arg2, %arg1 : i32, i32
  }
  func.func @transform_2(%arg0: i32, %arg1: i32, %arg2: i32) -> (i32, i32) {
    %c0_i32 = arith.constant 0 : i32
    %c0_i32_0 = arith.constant 0 : i32
    return %c0_i32, %arg1 : i32, i32
  }
  func.func @transform_3(%arg0: i32, %arg1: i32, %arg2: i32) -> (i32, i32) {
    %c0_i32 = arith.constant 0 : i32
    return %arg0, %arg1 : i32, i32
  }
}

</mosaic_0001>

<llo_original>
// kernel: ring_cross_attention_forward.4
$region0: #{ring_cross_attention_forward.4}
  #allocation0 [shape = 'u32[]', space=smem, size = 0x4, offset = 0x4, fixed_abs, tag = 'smem constant byte address 0x4 - core index']
  #allocation1 [shape = 'u32[144,128]{1,0:T(1,128)}', space=vmem, size = 0x12000, scoped, tag = 'internal scratch']
  #allocation2 [shape = 'f32[16,256]{1,0:T(8,128)}', space=vmem, size = 0x4000, scoped, tag = 'scratch operand']
  %s0 = inlined_call_operand.vmem [shape: bf16[16,256], index: 0, kind: input, shape index: {}]
  %s1 = inlined_call_operand.vmem [shape: bf16[256,256], index: 1, kind: input, shape index: {}]
  %s2 = inlined_call_operand.vmem [shape: f32[1,256], index: 2, kind: input, shape index: {}]
  %s3 = inlined_call_operand.vmem [shape: bf16[16,256], index: 3, kind: output, shape index: {}]
  %s4 = sld [smem:[#allocation0]]
  $region30: #{ring_cross_attention_forward.4} parent=0
    _
  %s6 = ssub.s32 1, %s4
  %s7 = scalar_select 0, %s6, %s4
  // Predicated region
  $region2: #{ring_cross_attention_forward.4} parent=0 // pred_check
    _
  $region3: #{ring_cross_attention_forward.4} parent=0 // pred_check_branch
    %9 = sbr.rel (0) target = $region5
  $region4: #{ring_cross_attention_forward.4} parent=0 // pred_region
    _
  $region5: #{ring_cross_attention_forward.4} parent=0 // pred_fallthru
    _
  // Predicated region
  $region6: #{ring_cross_attention_forward.4} parent=0 // pred_check
    _
  $region7: #{ring_cross_attention_forward.4} parent=0 // pred_check_branch
    %11 = sbr.rel (0) target = $region9
  $region8: #{ring_cross_attention_forward.4} parent=0 // pred_region
    _
  $region9: #{ring_cross_attention_forward.4} parent=0 // pred_fallthru
    _
  // Predicated region
  $region10: #{ring_cross_attention_forward.4} parent=0 // pred_check
    _
  $region11: #{ring_cross_attention_forward.4} parent=0 // pred_check_branch
    %13 = sbr.rel (0) target = $region13
  $region12: #{ring_cross_attention_forward.4} parent=0 // pred_region
    _
  $region13: #{ring_cross_attention_forward.4} parent=0 // pred_fallthru
    _
  %p14 = scmp.eq.s32.totalorder 0, 0
  // Predicated region
  $region14: #{ring_cross_attention_forward.4} parent=0 // pred_check
    %p15 = pneg %p14
  $region15: #{ring_cross_attention_forward.4} parent=0 // pred_check_branch
    %17 = sbr.rel (%p15) target = $region17
  $region16: #{ring_cross_attention_forward.4} parent=0 // pred_region
    %18 = vst [vmem:[#allocation2] sm:$0xff] 0.0
    %19 = vst [vmem:[#allocation2 + $0x8] sm:$0xff] 0.0
    %20 = vst [vmem:[#allocation2 + $0x10] sm:$0xff] 0.0
    %21 = vst [vmem:[#allocation2 + $0x18] sm:$0xff] 0.0
  $region17: #{ring_cross_attention_forward.4} parent=0 // pred_fallthru
    _
  %v22 = vld [vmem:[#allocation2] sm:$0xff]
  %v23 = vld [vmem:[#allocation2 + $0x8] sm:$0xff]
  %v24 = vld [vmem:[#allocation2 + $0x10] sm:$0xff]
  %v25 = vld [vmem:[#allocation2 + $0x18] sm:$0xff]
  %v26 = vld [vmem:[%s0] sm:$0xff]
  %v27 = vld [vmem:[%s0 + $0x8] sm:$0xff]
  %v28 = vld [vmem:[%s1] sm:$0xff]
  %v29 = vld [vmem:[%s1 + $0x8] sm:$0xff]
  %v30 = vld [vmem:[%s1 + $0x10] sm:$0xff]
  %v31 = vld [vmem:[%s1 + $0x18] sm:$0xff]
  %v32 = vld [vmem:[%s1 + $0x20] sm:$0xff]
  %v33 = vld [vmem:[%s1 + $0x28] sm:$0xff]
  %v34 = vld [vmem:[%s1 + $0x30] sm:$0xff]
  %v35 = vld [vmem:[%s1 + $0x38] sm:$0xff]
  %v36 = vld [vmem:[%s1 + $0x40] sm:$0xff]
  %v37 = vld [vmem:[%s1 + $0x48] sm:$0xff]
  %v38 = vld [vmem:[%s1 + $0x50] sm:$0xff]
  %v39 = vld [vmem:[%s1 + $0x58] sm:$0xff]
  %v40 = vld [vmem:[%s1 + $0x60] sm:$0xff]
  %v41 = vld [vmem:[%s1 + $0x68] sm:$0xff]
  %v42 = vld [vmem:[%s1 + $0x70] sm:$0xff]
  %v43 = vld [vmem:[%s1 + $0x78] sm:$0xff]
  %v44 = vld [vmem:[%s1 + $0x80] sm:$0xff]
  %v45 = vld [vmem:[%s1 + $0x88] sm:$0xff]
  %v46 = vld [vmem:[%s1 + $0x90] sm:$0xff]
  %v47 = vld [vmem:[%s1 + $0x98] sm:$0xff]
  %v48 = vld [vmem:[%s1 + $0xa0] sm:$0xff]
  %v49 = vld [vmem:[%s1 + $0xa8] sm:$0xff]
  %v50 = vld [vmem:[%s1 + $0xb0] sm:$0xff]
  %v51 = vld [vmem:[%s1 + $0xb8] sm:$0xff]
  %v52 = vld [vmem:[%s1 + $0xc0] sm:$0xff]
  %v53 = vld [vmem:[%s1 + $0xc8] sm:$0xff]
  %v54 = vld [vmem:[%s1 + $0xd0] sm:$0xff]
  %v55 = vld [vmem:[%s1 + $0xd8] sm:$0xff]
  %v56 = vld [vmem:[%s1 + $0xe0] sm:$0xff]
  %v57 = vld [vmem:[%s1 + $0xe8] sm:$0xff]
  %v58 = vld [vmem:[%s1 + $0xf0] sm:$0xff]
  %v59 = vld [vmem:[%s1 + $0xf8] sm:$0xff]
  %v62 = vunpack.c.l.b16 %v26
  %v63 = vunpack.c.h.b16 %v26
  %v64 = vunpack.c.l.b16 %v27
  %v65 = vunpack.c.h.b16 %v27
  %v66 = vpack.c.b16 %v64, %v62
  %v67 = vpack.c.b16 %v65, %v63
  %v102 = vunpack.c.l.b16 %v28
  %v103 = vunpack.c.h.b16 %v28
  %v104 = vunpack.c.l.b16 %v29
  %v105 = vunpack.c.h.b16 %v29
  %v106 = vunpack.c.l.b16 %v30
  %v107 = vunpack.c.h.b16 %v30
  %v108 = vunpack.c.l.b16 %v31
  %v109 = vunpack.c.h.b16 %v31
  %v110 = vunpack.c.l.b16 %v32
  %v111 = vunpack.c.h.b16 %v32
  %v112 = vunpack.c.l.b16 %v33
  %v113 = vunpack.c.h.b16 %v33
  %v114 = vunpack.c.l.b16 %v34
  %v115 = vunpack.c.h.b16 %v34
  %v116 = vunpack.c.l.b16 %v35
  %v117 = vunpack.c.h.b16 %v35
  %v118 = vunpack.c.l.b16 %v36
  %v119 = vunpack.c.h.b16 %v36
  %v120 = vunpack.c.l.b16 %v37
  %v121 = vunpack.c.h.b16 %v37
  %v122 = vunpack.c.l.b16 %v38
  %v123 = vunpack.c.h.b16 %v38
  %v124 = vunpack.c.l.b16 %v39
  %v125 = vunpack.c.h.b16 %v39
  %v126 = vunpack.c.l.b16 %v40
  %v127 = vunpack.c.h.b16 %v40
  %v128 = vunpack.c.l.b16 %v41
  %v129 = vunpack.c.h.b16 %v41
  %v130 = vunpack.c.l.b16 %v42
  %v131 = vunpack.c.h.b16 %v42
  %v132 = vunpack.c.l.b16 %v43
  %v133 = vunpack.c.h.b16 %v43
  %v134 = vunpack.c.l.b16 %v44
  %v135 = vunpack.c.h.b16 %v44
  %v136 = vunpack.c.l.b16 %v45
  %v137 = vunpack.c.h.b16 %v45
  %v138 = vunpack.c.l.b16 %v46
  %v139 = vunpack.c.h.b16 %v46
  %v140 = vunpack.c.l.b16 %v47
  %v141 = vunpack.c.h.b16 %v47
  %v142 = vunpack.c.l.b16 %v48
  %v143 = vunpack.c.h.b16 %v48
  %v144 = vunpack.c.l.b16 %v49
  %v145 = vunpack.c.h.b16 %v49
  %v146 = vunpack.c.l.b16 %v50
  %v147 = vunpack.c.h.b16 %v50
  %v148 = vunpack.c.l.b16 %v51
  %v149 = vunpack.c.h.b16 %v51
  %v150 = vunpack.c.l.b16 %v52
  %v151 = vunpack.c.h.b16 %v52
  %v152 = vunpack.c.l.b16 %v53
  %v153 = vunpack.c.h.b16 %v53
  %v154 = vunpack.c.l.b16 %v54
  %v155 = vunpack.c.h.b16 %v54
  %v156 = vunpack.c.l.b16 %v55
  %v157 = vunpack.c.h.b16 %v55
  %v158 = vunpack.c.l.b16 %v56
  %v159 = vunpack.c.h.b16 %v56
  %v160 = vunpack.c.l.b16 %v57
  %v161 = vunpack.c.h.b16 %v57
  %v162 = vunpack.c.l.b16 %v58
  %v163 = vunpack.c.h.b16 %v58
  %v164 = vunpack.c.l.b16 %v59
  %v165 = vunpack.c.h.b16 %v59
  %v166 = vpack.c.b16 %v104, %v102
  %v167 = vpack.c.b16 %v105, %v103
  %v168 = vpack.c.b16 %v108, %v106
  %v169 = vpack.c.b16 %v109, %v107
  %v170 = vpack.c.b16 %v112, %v110
  %v171 = vpack.c.b16 %v113, %v111
  %v172 = vpack.c.b16 %v116, %v114
  %v173 = vpack.c.b16 %v117, %v115
  %v174 = vpack.c.b16 %v120, %v118
  %v175 = vpack.c.b16 %v121, %v119
  %v176 = vpack.c.b16 %v124, %v122
  %v177 = vpack.c.b16 %v125, %v123
  %v178 = vpack.c.b16 %v128, %v126
  %v179 = vpack.c.b16 %v129, %v127
  %v180 = vpack.c.b16 %v132, %v130
  %v181 = vpack.c.b16 %v133, %v131
  %v182 = vpack.c.b16 %v136, %v134
  %v183 = vpack.c.b16 %v137, %v135
  %v184 = vpack.c.b16 %v140, %v138
  %v185 = vpack.c.b16 %v141, %v139
  %v186 = vpack.c.b16 %v144, %v142
  %v187 = vpack.c.b16 %v145, %v143
  %v188 = vpack.c.b16 %v148, %v146
  %v189 = vpack.c.b16 %v149, %v147
  %v190 = vpack.c.b16 %v152, %v150
  %v191 = vpack.c.b16 %v153, %v151
  %v192 = vpack.c.b16 %v156, %v154
  %v193 = vpack.c.b16 %v157, %v155
  %v194 = vpack.c.b16 %v160, %v158
  %v195 = vpack.c.b16 %v161, %v159
  %v196 = vpack.c.b16 %v164, %v162
  %v197 = vpack.c.b16 %v165, %v163
  %230 = vmatprep.subr.bf16.mxu0 %v167
  %231 = vmatpush1.bf16.msra.mxu0 %v166
  %232 = vmatprep.subr.bf16.mxu0 %v169
  %233 = vmatpush1.bf16.msra.mxu0 %v168
  %234 = vmatprep.subr.bf16.mxu0 %v171
  %235 = vmatpush1.bf16.msra.mxu0 %v170
  %236 = vmatprep.subr.bf16.mxu0 %v173
  %237 = vmatpush1.bf16.msra.mxu0 %v172
  %238 = vmatprep.subr.bf16.mxu0 %v175
  %239 = vmatpush1.bf16.msra.mxu0 %v174
  %240 = vmatprep.subr.bf16.mxu0 %v177
  %241 = vmatpush1.bf16.msra.mxu0 %v176
  %242 = vmatprep.subr.bf16.mxu0 %v179
  %243 = vmatpush1.bf16.msra.mxu0 %v178
  %244 = vmatprep.subr.bf16.mxu0 %v181
  %245 = vmatpush1.bf16.msra.mxu0 %v180
  %246 = vmatprep.subr.bf16.mxu0 %v183
  %247 = vmatpush1.bf16.msra.mxu0 %v182
  %248 = vmatprep.subr.bf16.mxu0 %v185
  %249 = vmatpush1.bf16.msra.mxu0 %v184
  %250 = vmatprep.subr.bf16.mxu0 %v187
  %251 = vmatpush1.bf16.msra.mxu0 %v186
  %252 = vmatprep.subr.bf16.mxu0 %v189
  %253 = vmatpush1.bf16.msra.mxu0 %v188
  %254 = vmatprep.subr.bf16.mxu0 %v191
  %255 = vmatpush1.bf16.msra.mxu0 %v190
  %256 = vmatprep.subr.bf16.mxu0 %v193
  %257 = vmatpush1.bf16.msra.mxu0 %v192
  %258 = vmatprep.subr.bf16.mxu0 %v195
  %259 = vmatpush1.bf16.msra.mxu0 %v194
  %260 = vmatprep.subr.bf16.mxu0 %v197
  %261 = vmatpush1.bf16.msra.mxu0 %v196
  %262 = vmatprep.mubr.bf16.mxu0 %v67
  %263 = vmatmul.mubr.bf16.gmra.mrb[0].mxu0 %v66
  %v264 = vpop.f32.mrb[0].mxu0
  %v265 = vadd.f32 0.0, %v264
  %v266 = vpop.f32.mrb[0].mxu0
  %v267 = vadd.f32 0.0, %v266
  %v268 = vpop.f32.mrb[0].mxu0
  %v269 = vadd.f32 0.0, %v268
  %v270 = vpop.f32.mrb[0].mxu0
  %v271 = vadd.f32 0.0, %v270
  %272 = vdwg.mxu0
  %v273 = vadd.f32 %v22, %v265
  %v274 = vadd.f32 %v23, %v267
  %v275 = vadd.f32 %v24, %v269
  %v276 = vadd.f32 %v25, %v271
  %277 = vst [vmem:[#allocation2] sm:$0xff] %v273
  %278 = vst [vmem:[#allocation2 + $0x8] sm:$0xff] %v274
  %279 = vst [vmem:[#allocation2 + $0x10] sm:$0xff] %v275
  %280 = vst [vmem:[#allocation2 + $0x18] sm:$0xff] %v276
  // Predicated region
  $region18: #{ring_cross_attention_forward.4} parent=0 // pred_check
    %p281 = pneg %p14
  $region19: #{ring_cross_attention_forward.4} parent=0 // pred_check_branch
    %283 = sbr.rel (%p281) target = $region21
  $region20: #{ring_cross_attention_forward.4} parent=0 // pred_region
    %v284 = vld [vmem:[#allocation2] sm:$0xff]
    %v285 = vld [vmem:[#allocation2 + $0x8] sm:$0xff]
    %v286 = vld [vmem:[#allocation2 + $0x10] sm:$0xff]
    %v287 = vld [vmem:[#allocation2 + $0x18] sm:$0xff]
    %v288 = vld [vmem:[%s2] sm:$0x3]
    %v290 = vlaneseq
    %v291 = vshrl.u32 %v290, 7
    %v292 = vsub.s32 0, %v291
    %v293 = vrot.slane %v288, %v292
    %v294 = vlaneseq
    %v295 = vshrl.u32 %v294, 7
    %v296 = vsub.s32 1, %v295
    %v297 = vrot.slane %v288, %v296
    %v300 = vadd.f32 %v284, %v293
    %v301 = vadd.f32 %v285, %v297
    %v302 = vadd.f32 %v286, %v293
    %v303 = vadd.f32 %v287, %v297
    %v304 = vpack.c.bf16 %v302, %v300
    %v305 = vpack.c.bf16 %v303, %v301
    %v308 = vunpack.c.l.b16 %v304
    %v309 = vunpack.c.l.b16 %v305
    %v310 = vunpack.c.h.b16 %v304
    %v311 = vunpack.c.h.b16 %v305
    %v312 = vpack.c.b16 %v309, %v308
    %v313 = vpack.c.b16 %v311, %v310
    %316 = vst [vmem:[%s3] sm:$0xff] %v312
    %317 = vst [vmem:[%s3 + $0x8] sm:$0xff] %v313
  $region21: #{ring_cross_attention_forward.4} parent=0 // pred_fallthru
    _
  // Predicated region
  $region22: #{ring_cross_attention_forward.4} parent=0 // pred_check
    _
  $region23: #{ring_cross_attention_forward.4} parent=0 // pred_check_branch
    %319 = sbr.rel (0) target = $region25
  $region24: #{ring_cross_attention_forward.4} parent=0 // pred_region
    _
  $region25: #{ring_cross_attention_forward.4} parent=0 // pred_fallthru
    _
  // Predicated region
  $region26: #{ring_cross_attention_forward.4} parent=0 // pred_check
    _
  $region27: #{ring_cross_attention_forward.4} parent=0 // pred_check_branch
    %321 = sbr.rel (0) target = $region29
  $region28: #{ring_cross_attention_forward.4} parent=0 // pred_region
    _
  $region29: #{ring_cross_attention_forward.4} parent=0 // pred_fallthru
    _

// kernel: ring_cross_attention_forward.7
$region0: #{ring_cross_attention_forward.7}
  #allocation0 [shape = 'u32[]', space=smem, size = 0x4, offset = 0x4, fixed_abs, tag = 'smem constant byte address 0x4 - core index']
  #allocation1 [shape = 'u32[144,128]{1,0:T(1,128)}', space=vmem, size = 0x12000, scoped, tag = 'internal scratch']
  #allocation2 [shape = 'f32[16,256]{1,0:T(8,128)}', space=vmem, size = 0x4000, scoped, tag = 'scratch operand']
  %s0 = inlined_call_operand.vmem [shape: bf16[16,256], index: 0, kind: input, shape index: {}]
  %s1 = inlined_call_operand.vmem [shape: bf16[256,256], index: 1, kind: input, shape index: {}]
  %s2 = inlined_call_operand.vmem [shape: f32[1,256], index: 2, kind: input, shape index: {}]
  %s3 = inlined_call_operand.hbm [shape: f32[16,256], index: 3, kind: output, shape index: {}]
  %s4 = sld [smem:[#allocation0]]
  $region30: #{ring_cross_attention_forward.7} parent=0
    _
  %s6 = ssub.s32 1, %s4
  %s7 = scalar_select 0, %s6, %s4
  $region1: #{ring_cross_attention_forward.7} parent=0
    #allocation3 [shape = 'u8[16384]{0}', space=vmem, size = 0x4000, scoped, tag = 'output window, operand 0, single buffered']
    #allocation4 [shape = 's32[1]{0}', space=sflag, size = 0x4, scoped, tag = 'scoped memory for ring_cross_attention_forward.7']
    %8 = vsyncpa [#allocation4], 0
    // Predicated region
    $region2: #{ring_cross_attention_forward.7} parent=1 // pred_check
      _
    $region3: #{ring_cross_attention_forward.7} parent=1 // pred_check_branch
      %10 = sbr.rel (0) target = $region5
    $region4: #{ring_cross_attention_forward.7} parent=1 // pred_region
      _
    $region5: #{ring_cross_attention_forward.7} parent=1 // pred_fallthru
      _
    // Predicated region
    $region6: #{ring_cross_attention_forward.7} parent=1 // pred_check
      _
    $region7: #{ring_cross_attention_forward.7} parent=1 // pred_check_branch
      %12 = sbr.rel (0) target = $region9
    $region8: #{ring_cross_attention_forward.7} parent=1 // pred_region
      _
    $region9: #{ring_cross_attention_forward.7} parent=1 // pred_fallthru
      _
    // Predicated region
    $region10: #{ring_cross_attention_forward.7} parent=1 // pred_check
      _
    $region11: #{ring_cross_attention_forward.7} parent=1 // pred_check_branch
      %14 = sbr.rel (0) target = $region13
    $region12: #{ring_cross_attention_forward.7} parent=1 // pred_region
      _
    $region13: #{ring_cross_attention_forward.7} parent=1 // pred_fallthru
      _
    %p15 = scmp.eq.s32.totalorder 0, 0
    // Predicated region
    $region14: #{ring_cross_attention_forward.7} parent=1 // pred_check
      %p16 = pneg %p15
    $region15: #{ring_cross_attention_forward.7} parent=1 // pred_check_branch
      %18 = sbr.rel (%p16) target = $region17
    $region16: #{ring_cross_attention_forward.7} parent=1 // pred_region
      %19 = vst [vmem:[#allocation2] sm:$0xff] 0.0
      %20 = vst [vmem:[#allocation2 + $0x8] sm:$0xff] 0.0
      %21 = vst [vmem:[#allocation2 + $0x10] sm:$0xff] 0.0
      %22 = vst [vmem:[#allocation2 + $0x18] sm:$0xff] 0.0
    $region17: #{ring_cross_attention_forward.7} parent=1 // pred_fallthru
      _
    %v23 = vld [vmem:[#allocation2] sm:$0xff]
    %v24 = vld [vmem:[#allocation2 + $0x8] sm:$0xff]
    %v25 = vld [vmem:[#allocation2 + $0x10] sm:$0xff]
    %v26 = vld [vmem:[#allocation2 + $0x18] sm:$0xff]
    %v27 = vld [vmem:[%s0] sm:$0xff]
    %v28 = vld [vmem:[%s0 + $0x8] sm:$0xff]
    %v29 = vld [vmem:[%s1] sm:$0xff]
    %v30 = vld [vmem:[%s1 + $0x8] sm:$0xff]
    %v31 = vld [vmem:[%s1 + $0x10] sm:$0xff]
    %v32 = vld [vmem:[%s1 + $0x18] sm:$0xff]
    %v33 = vld [vmem:[%s1 + $0x20] sm:$0xff]
    %v34 = vld [vmem:[%s1 + $0x28] sm:$0xff]
    %v35 = vld [vmem:[%s1 + $0x30] sm:$0xff]
    %v36 = vld [vmem:[%s1 + $0x38] sm:$0xff]
    %v37 = vld [vmem:[%s1 + $0x40] sm:$0xff]
    %v38 = vld [vmem:[%s1 + $0x48] sm:$0xff]
    %v39 = vld [vmem:[%s1 + $0x50] sm:$0xff]
    %v40 = vld [vmem:[%s1 + $0x58] sm:$0xff]
    %v41 = vld [vmem:[%s1 + $0x60] sm:$0xff]
    %v42 = vld [vmem:[%s1 + $0x68] sm:$0xff]
    %v43 = vld [vmem:[%s1 + $0x70] sm:$0xff]
    %v44 = vld [vmem:[%s1 + $0x78] sm:$0xff]
    %v45 = vld [vmem:[%s1 + $0x80] sm:$0xff]
    %v46 = vld [vmem:[%s1 + $0x88] sm:$0xff]
    %v47 = vld [vmem:[%s1 + $0x90] sm:$0xff]
    %v48 = vld [vmem:[%s1 + $0x98] sm:$0xff]
    %v49 = vld [vmem:[%s1 + $0xa0] sm:$0xff]
    %v50 = vld [vmem:[%s1 + $0xa8] sm:$0xff]
    %v51 = vld [vmem:[%s1 + $0xb0] sm:$0xff]
    %v52 = vld [vmem:[%s1 + $0xb8] sm:$0xff]
    %v53 = vld [vmem:[%s1 + $0xc0] sm:$0xff]
    %v54 = vld [vmem:[%s1 + $0xc8] sm:$0xff]
    %v55 = vld [vmem:[%s1 + $0xd0] sm:$0xff]
    %v56 = vld [vmem:[%s1 + $0xd8] sm:$0xff]
    %v57 = vld [vmem:[%s1 + $0xe0] sm:$0xff]
    %v58 = vld [vmem:[%s1 + $0xe8] sm:$0xff]
    %v59 = vld [vmem:[%s1 + $0xf0] sm:$0xff]
    %v60 = vld [vmem:[%s1 + $0xf8] sm:$0xff]
    %v63 = vunpack.c.l.b16 %v27
    %v64 = vunpack.c.h.b16 %v27
    %v65 = vunpack.c.l.b16 %v28
    %v66 = vunpack.c.h.b16 %v28
    %v67 = vpack.c.b16 %v65, %v63
    %v68 = vpack.c.b16 %v66, %v64
    %v103 = vunpack.c.l.b16 %v29
    %v104 = vunpack.c.h.b16 %v29
    %v105 = vunpack.c.l.b16 %v30
    %v106 = vunpack.c.h.b16 %v30
    %v107 = vunpack.c.l.b16 %v31
    %v108 = vunpack.c.h.b16 %v31
    %v109 = vunpack.c.l.b16 %v32
    %v110 = vunpack.c.h.b16 %v32
    %v111 = vunpack.c.l.b16 %v33
    %v112 = vunpack.c.h.b16 %v33
    %v113 = vunpack.c.l.b16 %v34
    %v114 = vunpack.c.h.b16 %v34
    %v115 = vunpack.c.l.b16 %v35
    %v116 = vunpack.c.h.b16 %v35
    %v117 = vunpack.c.l.b16 %v36
    %v118 = vunpack.c.h.b16 %v36
    %v119 = vunpack.c.l.b16 %v37
    %v120 = vunpack.c.h.b16 %v37
    %v121 = vunpack.c.l.b16 %v38
    %v122 = vunpack.c.h.b16 %v38
    %v123 = vunpack.c.l.b16 %v39
    %v124 = vunpack.c.h.b16 %v39
    %v125 = vunpack.c.l.b16 %v40
    %v126 = vunpack.c.h.b16 %v40
    %v127 = vunpack.c.l.b16 %v41
    %v128 = vunpack.c.h.b16 %v41
    %v129 = vunpack.c.l.b16 %v42
    %v130 = vunpack.c.h.b16 %v42
    %v131 = vunpack.c.l.b16 %v43
    %v132 = vunpack.c.h.b16 %v43
    %v133 = vunpack.c.l.b16 %v44
    %v134 = vunpack.c.h.b16 %v44
    %v135 = vunpack.c.l.b16 %v45
    %v136 = vunpack.c.h.b16 %v45
    %v137 = vunpack.c.l.b16 %v46
    %v138 = vunpack.c.h.b16 %v46
    %v139 = vunpack.c.l.b16 %v47
    %v140 = vunpack.c.h.b16 %v47
    %v141 = vunpack.c.l.b16 %v48
    %v142 = vunpack.c.h.b16 %v48
    %v143 = vunpack.c.l.b16 %v49
    %v144 = vunpack.c.h.b16 %v49
    %v145 = vunpack.c.l.b16 %v50
    %v146 = vunpack.c.h.b16 %v50
    %v147 = vunpack.c.l.b16 %v51
    %v148 = vunpack.c.h.b16 %v51
    %v149 = vunpack.c.l.b16 %v52
    %v150 = vunpack.c.h.b16 %v52
    %v151 = vunpack.c.l.b16 %v53
    %v152 = vunpack.c.h.b16 %v53
    %v153 = vunpack.c.l.b16 %v54
    %v154 = vunpack.c.h.b16 %v54
    %v155 = vunpack.c.l.b16 %v55
    %v156 = vunpack.c.h.b16 %v55
    %v157 = vunpack.c.l.b16 %v56
    %v158 = vunpack.c.h.b16 %v56
    %v159 = vunpack.c.l.b16 %v57
    %v160 = vunpack.c.h.b16 %v57
    %v161 = vunpack.c.l.b16 %v58
    %v162 = vunpack.c.h.b16 %v58
    %v163 = vunpack.c.l.b16 %v59
    %v164 = vunpack.c.h.b16 %v59
    %v165 = vunpack.c.l.b16 %v60
    %v166 = vunpack.c.h.b16 %v60
    %v167 = vpack.c.b16 %v105, %v103
    %v168 = vpack.c.b16 %v106, %v104
    %v169 = vpack.c.b16 %v109, %v107
    %v170 = vpack.c.b16 %v110, %v108
    %v171 = vpack.c.b16 %v113, %v111
    %v172 = vpack.c.b16 %v114, %v112
    %v173 = vpack.c.b16 %v117, %v115
    %v174 = vpack.c.b16 %v118, %v116
    %v175 = vpack.c.b16 %v121, %v119
    %v176 = vpack.c.b16 %v122, %v120
    %v177 = vpack.c.b16 %v125, %v123
    %v178 = vpack.c.b16 %v126, %v124
    %v179 = vpack.c.b16 %v129, %v127
    %v180 = vpack.c.b16 %v130, %v128
    %v181 = vpack.c.b16 %v133, %v131
    %v182 = vpack.c.b16 %v134, %v132
    %v183 = vpack.c.b16 %v137, %v135
    %v184 = vpack.c.b16 %v138, %v136
    %v185 = vpack.c.b16 %v141, %v139
    %v186 = vpack.c.b16 %v142, %v140
    %v187 = vpack.c.b16 %v145, %v143
    %v188 = vpack.c.b16 %v146, %v144
    %v189 = vpack.c.b16 %v149, %v147
    %v190 = vpack.c.b16 %v150, %v148
    %v191 = vpack.c.b16 %v153, %v151
    %v192 = vpack.c.b16 %v154, %v152
    %v193 = vpack.c.b16 %v157, %v155
    %v194 = vpack.c.b16 %v158, %v156
    %v195 = vpack.c.b16 %v161, %v159
    %v196 = vpack.c.b16 %v162, %v160
    %v197 = vpack.c.b16 %v165, %v163
    %v198 = vpack.c.b16 %v166, %v164
    %231 = vmatprep.subr.bf16.mxu0 %v168
    %232 = vmatpush1.bf16.msra.mxu0 %v167
    %233 = vmatprep.subr.bf16.mxu0 %v170
    %234 = vmatpush1.bf16.msra.mxu0 %v169
    %235 = vmatprep.subr.bf16.mxu0 %v172
    %236 = vmatpush1.bf16.msra.mxu0 %v171
    %237 = vmatprep.subr.bf16.mxu0 %v174
    %238 = vmatpush1.bf16.msra.mxu0 %v173
    %239 = vmatprep.subr.bf16.mxu0 %v176
    %240 = vmatpush1.bf16.msra.mxu0 %v175
    %241 = vmatprep.subr.bf16.mxu0 %v178
    %242 = vmatpush1.bf16.msra.mxu0 %v177
    %243 = vmatprep.subr.bf16.mxu0 %v180
    %244 = vmatpush1.bf16.msra.mxu0 %v179
    %245 = vmatprep.subr.bf16.mxu0 %v182
    %246 = vmatpush1.bf16.msra.mxu0 %v181
    %247 = vmatprep.subr.bf16.mxu0 %v184
    %248 = vmatpush1.bf16.msra.mxu0 %v183
    %249 = vmatprep.subr.bf16.mxu0 %v186
    %250 = vmatpush1.bf16.msra.mxu0 %v185
    %251 = vmatprep.subr.bf16.mxu0 %v188
    %252 = vmatpush1.bf16.msra.mxu0 %v187
    %253 = vmatprep.subr.bf16.mxu0 %v190
    %254 = vmatpush1.bf16.msra.mxu0 %v189
    %255 = vmatprep.subr.bf16.mxu0 %v192
    %256 = vmatpush1.bf16.msra.mxu0 %v191
    %257 = vmatprep.subr.bf16.mxu0 %v194
    %258 = vmatpush1.bf16.msra.mxu0 %v193
    %259 = vmatprep.subr.bf16.mxu0 %v196
    %260 = vmatpush1.bf16.msra.mxu0 %v195
    %261 = vmatprep.subr.bf16.mxu0 %v198
    %262 = vmatpush1.bf16.msra.mxu0 %v197
    %263 = vmatprep.mubr.bf16.mxu0 %v68
    %264 = vmatmul.mubr.bf16.gmra.mrb[0].mxu0 %v67
    %v265 = vpop.f32.mrb[0].mxu0
    %v266 = vadd.f32 0.0, %v265
    %v267 = vpop.f32.mrb[0].mxu0
    %v268 = vadd.f32 0.0, %v267
    %v269 = vpop.f32.mrb[0].mxu0
    %v270 = vadd.f32 0.0, %v269
    %v271 = vpop.f32.mrb[0].mxu0
    %v272 = vadd.f32 0.0, %v271
    %273 = vdwg.mxu0
    %v274 = vadd.f32 %v23, %v266
    %v275 = vadd.f32 %v24, %v268
    %v276 = vadd.f32 %v25, %v270
    %v277 = vadd.f32 %v26, %v272
    %278 = vst [vmem:[#allocation2] sm:$0xff] %v274
    %279 = vst [vmem:[#allocation2 + $0x8] sm:$0xff] %v275
    %280 = vst [vmem:[#allocation2 + $0x10] sm:$0xff] %v276
    %281 = vst [vmem:[#allocation2 + $0x18] sm:$0xff] %v277
    // Predicated region
    $region18: #{ring_cross_attention_forward.7} parent=1 // pred_check
      %p282 = pneg %p15
    $region19: #{ring_cross_attention_forward.7} parent=1 // pred_check_branch
      %284 = sbr.rel (%p282) target = $region21
    $region20: #{ring_cross_attention_forward.7} parent=1 // pred_region
      %v285 = vld [vmem:[#allocation2] sm:$0xff]
      %v286 = vld [vmem:[#allocation2 + $0x8] sm:$0xff]
      %v287 = vld [vmem:[#allocation2 + $0x10] sm:$0xff]
      %v288 = vld [vmem:[#allocation2 + $0x18] sm:$0xff]
      %v289 = vld [vmem:[%s2] sm:$0x3]
      %v291 = vlaneseq
      %v292 = vshrl.u32 %v291, 7
      %v293 = vsub.s32 0, %v292
      %v294 = vrot.slane %v289, %v293
      %v295 = vlaneseq
      %v296 = vshrl.u32 %v295, 7
      %v297 = vsub.s32 1, %v296
      %v298 = vrot.slane %v289, %v297
      %v301 = vadd.f32 %v285, %v294
      %v302 = vadd.f32 %v286, %v298
      %v303 = vadd.f32 %v287, %v294
      %v304 = vadd.f32 %v288, %v298
      %305 = vst [vmem:[#allocation3] sm:$0xff] %v301
      %306 = vst [vmem:[#allocation3 + $0x8] sm:$0xff] %v302
      %307 = vst [vmem:[#allocation3 + $0x10] sm:$0xff] %v303
      %308 = vst [vmem:[#allocation3 + $0x18] sm:$0xff] %v304
    $region21: #{ring_cross_attention_forward.7} parent=1 // pred_fallthru
      _
    // Predicated region
    $region22: #{ring_cross_attention_forward.7} parent=1 // pred_check
      _
    $region23: #{ring_cross_attention_forward.7} parent=1 // pred_check_branch
      %310 = sbr.rel (0) target = $region25
    $region24: #{ring_cross_attention_forward.7} parent=1 // pred_region
      %s312 = ssub.s32 512, 512
      %313 = vsyncadd [#allocation4], %s312
      %s314 = sshll.u32 [#allocation3], 4
      %s315 = int_to_ptr.vmem [resolvable:$true] %s314
      %320 = dma.vmem_to_hbm [thread:$0]  %s315, 512, %s3, [#allocation4], 256, 256, 16
    $region25: #{ring_cross_attention_forward.7} parent=1 // pred_fallthru
      _
    // Predicated region
    $region26: #{ring_cross_attention_forward.7} parent=1 // pred_check
      _
    $region27: #{ring_cross_attention_forward.7} parent=1 // pred_check_branch
      %322 = sbr.rel (0) target = $region29
    $region28: #{ring_cross_attention_forward.7} parent=1 // pred_region
      %323 = dma.done [#allocation4], 512
    $region29: #{ring_cross_attention_forward.7} parent=1 // pred_fallthru
      _
    %324 = vsyncpa [#allocation4], 1

// kernel: ring_cross_attention_forward.5
$region0: #{ring_cross_attention_forward.5}
  #allocation0 [shape = 'u32[]', space=smem, size = 0x4, offset = 0x4, fixed_abs, tag = 'smem constant byte address 0x4 - core index']
  #allocation1 [shape = 'u32[144,128]{1,0:T(1,128)}', space=vmem, size = 0x12000, scoped, tag = 'internal scratch']
  #allocation2 [shape = 'f32[32,256]{1,0:T(8,128)}', space=vmem, size = 0x8000, scoped, tag = 'scratch operand']
  #allocation3 [shape = 'f32[32,256]{1,0:T(8,128)}', space=vmem, size = 0x8000, scoped, tag = 'scratch operand']
  %s0 = inlined_call_operand.vmem [shape: bf16[32,256], index: 0, kind: input, shape index: {}]
  %s1 = inlined_call_operand.hbm [shape: bf16[256,256], index: 1, kind: input, shape index: {}]
  %s2 = inlined_call_operand.hbm [shape: bf16[256,256], index: 2, kind: input, shape index: {}]
  %s3 = inlined_call_operand.vmem [shape: f32[1,256], index: 3, kind: input, shape index: {}]
  %s4 = inlined_call_operand.vmem [shape: f32[1,256], index: 4, kind: input, shape index: {}]
  %s5 = inlined_call_operand.vmem [shape: bf16[32,256], index: 5, kind: output, shape index: {0}]
  %s6 = inlined_call_operand.vmem [shape: bf16[32,256], index: 6, kind: output, shape index: {1}]
  %7 = xla_tuple %s5, %s6
  %s8 = sld [smem:[#allocation0]]
  $region54: #{ring_cross_attention_forward.5} parent=0
    _
  %s10 = ssub.s32 1, %s8
  %s11 = scalar_select 0, %s10, %s8
  $region1: #{ring_cross_attention_forward.5} parent=0
    #allocation4 [shape = 'u8[131072]{0}', space=vmem, size = 0x20000, scoped, tag = 'input window, operand 1, single buffered']
    #allocation5 [shape = 's32[1]{0}', space=sflag, size = 0x4, scoped, tag = 'scoped memory for ring_cross_attention_forward.5']
    #allocation6 [shape = 'u8[131072]{0}', space=vmem, size = 0x20000, scoped, tag = 'input window, operand 2, single buffered']
    #allocation7 [shape = 's32[1]{0}', space=sflag, size = 0x4, scoped, tag = 'scoped memory for ring_cross_attention_forward.5']
    %12 = vsyncpa [#allocation5], 0
    %13 = vsyncpa [#allocation7], 0
    // Predicated region
    $region2: #{ring_cross_attention_forward.5} parent=1 // pred_check
      _
    $region3: #{ring_cross_attention_forward.5} parent=1 // pred_check_branch
      %15 = sbr.rel (0) target = $region5
    $region4: #{ring_cross_attention_forward.5} parent=1 // pred_region
      _
    $region5: #{ring_cross_attention_forward.5} parent=1 // pred_fallthru
      _
    // Predicated region
    $region6: #{ring_cross_attention_forward.5} parent=1 // pred_check
      _
    $region7: #{ring_cross_attention_forward.5} parent=1 // pred_check_branch
      %17 = sbr.rel (0) target = $region9
    $region8: #{ring_cross_attention_forward.5} parent=1 // pred_region
      %s19 = ssub.s32 4096, 4096
      %20 = vsyncadd [#allocation5], %s19
      %s21 = sshll.u32 [#allocation4], 4
      %s22 = int_to_ptr.vmem [resolvable:$true] %s21
      %27 = dma.hbm_to_vmem [thread:$0]  %s1, 4096, %s22, [#allocation5], 128, 128, 8
    $region9: #{ring_cross_attention_forward.5} parent=1 // pred_fallthru
      _
    // Predicated region
    $region10: #{ring_cross_attention_forward.5} parent=1 // pred_check
      _
    $region11: #{ring_cross_attention_forward.5} parent=1 // pred_check_branch
      %29 = sbr.rel (0) target = $region13
    $region12: #{ring_cross_attention_forward.5} parent=1 // pred_region
      %s31 = ssub.s32 4096, 4096
      %32 = vsyncadd [#allocation7], %s31
      %s33 = sshll.u32 [#allocation6], 4
      %s34 = int_to_ptr.vmem [resolvable:$true] %s33
      %39 = dma.hbm_to_vmem [thread:$0]  %s2, 4096, %s34, [#allocation7], 128, 128, 8
    $region13: #{ring_cross_attention_forward.5} parent=1 // pred_fallthru
      _
    // Predicated region
    $region14: #{ring_cross_attention_forward.5} parent=1 // pred_check
      _
    $region15: #{ring_cross_attention_forward.5} parent=1 // pred_check_branch
      %41 = sbr.rel (0) target = $region17
    $region16: #{ring_cross_attention_forward.5} parent=1 // pred_region
      _
    $region17: #{ring_cross_attention_forward.5} parent=1 // pred_fallthru
      _
    // Predicated region
    $region18: #{ring_cross_attention_forward.5} parent=1 // pred_check
      _
    $region19: #{ring_cross_attention_forward.5} parent=1 // pred_check_branch
      %43 = sbr.rel (0) target = $region21
    $region20: #{ring_cross_attention_forward.5} parent=1 // pred_region
      _
    $region21: #{ring_cross_attention_forward.5} parent=1 // pred_fallthru
      _
    // Predicated region
    $region22: #{ring_cross_attention_forward.5} parent=1 // pred_check
      _
    $region23: #{ring_cross_attention_forward.5} parent=1 // pred_check_branch
      %45 = sbr.rel (0) target = $region25
    $region24: #{ring_cross_attention_forward.5} parent=1 // pred_region
      %46 = dma.done [#allocation5], 4096
    $region25: #{ring_cross_attention_forward.5} parent=1 // pred_fallthru
      _
    // Predicated region
    $region26: #{ring_cross_attention_forward.5} parent=1 // pred_check
      _
    $region27: #{ring_cross_attention_forward.5} parent=1 // pred_check_branch
      %48 = sbr.rel (0) target = $region29
    $region28: #{ring_cross_attention_forward.5} parent=1 // pred_region
      %49 = dma.done [#allocation7], 4096
    $region29: #{ring_cross_attention_forward.5} parent=1 // pred_fallthru
      _
    %p50 = scmp.eq.s32.totalorder 0, 0
    // Predicated region
    $region30: #{ring_cross_attention_forward.5} parent=1 // pred_check
      %p51 = pneg %p50
    $region31: #{ring_cross_attention_forward.5} parent=1 // pred_check_branch
      %53 = sbr.rel (%p51) target = $region33
    $region32: #{ring_cross_attention_forward.5} parent=1 // pred_region
      %54 = vst [vmem:[#allocation2] sm:$0xff] 0.0
      %55 = vst [vmem:[#allocation2 + $0x8] sm:$0xff] 0.0
      %56 = vst [vmem:[#allocation2 + $0x10] sm:$0xff] 0.0
      %57 = vst [vmem:[#allocation2 + $0x18] sm:$0xff] 0.0
      %58 = vst [vmem:[#allocation2 + $0x20] sm:$0xff] 0.0
      %59 = vst [vmem:[#allocation2 + $0x28] sm:$0xff] 0.0
      %60 = vst [vmem:[#allocation2 + $0x30] sm:$0xff] 0.0
      %61 = vst [vmem:[#allocation2 + $0x38] sm:$0xff] 0.0
      %62 = vst [vmem:[#allocation3] sm:$0xff] 0.0
      %63 = vst [vmem:[#allocation3 + $0x8] sm:$0xff] 0.0
      %64 = vst [vmem:[#allocation3 + $0x10] sm:$0xff] 0.0
      %65 = vst [vmem:[#allocation3 + $0x18] sm:$0xff] 0.0
      %66 = vst [vmem:[#allocation3 + $0x20] sm:$0xff] 0.0
      %67 = vst [vmem:[#allocation3 + $0x28] sm:$0xff] 0.0
      %68 = vst [vmem:[#allocation3 + $0x30] sm:$0xff] 0.0
      %69 = vst [vmem:[#allocation3 + $0x38] sm:$0xff] 0.0
    $region33: #{ring_cross_attention_forward.5} parent=1 // pred_fallthru
      _
    %v70 = vld [vmem:[%s0] sm:$0xff]
    %v71 = vld [vmem:[%s0 + $0x8] sm:$0xff]
    %v72 = vld [vmem:[%s0 + $0x10] sm:$0xff]
    %v73 = vld [vmem:[%s0 + $0x18] sm:$0xff]
    %v74 = vld [vmem:[#allocation2] sm:$0xff]
    %v75 = vld [vmem:[#allocation2 + $0x8] sm:$0xff]
    %v76 = vld [vmem:[#allocation2 + $0x10] sm:$0xff]
    %v77 = vld [vmem:[#allocation2 + $0x18] sm:$0xff]
    %v78 = vld [vmem:[#allocation2 + $0x20] sm:$0xff]
    %v79 = vld [vmem:[#allocation2 + $0x28] sm:$0xff]
    %v80 = vld [vmem:[#allocation2 + $0x30] sm:$0xff]
    %v81 = vld [vmem:[#allocation2 + $0x38] sm:$0xff]
    %v82 = vld [vmem:[#allocation4] sm:$0xff]
    %v83 = vld [vmem:[#allocation4 + $0x8] sm:$0xff]
    %v84 = vld [vmem:[#allocation4 + $0x10] sm:$0xff]
    %v85 = vld [vmem:[#allocation4 + $0x18] sm:$0xff]
    %v86 = vld [vmem:[#allocation4 + $0x20] sm:$0xff]
    %v87 = vld [vmem:[#allocation4 + $0x28] sm:$0xff]
    %v88 = vld [vmem:[#allocation4 + $0x30] sm:$0xff]
    %v89 = vld [vmem:[#allocation4 + $0x38] sm:$0xff]
    %v90 = vld [vmem:[#allocation4 + $0x40] sm:$0xff]
    %v91 = vld [vmem:[#allocation4 + $0x48] sm:$0xff]
    %v92 = vld [vmem:[#allocation4 + $0x50] sm:$0xff]
    %v93 = vld [vmem:[#allocation4 + $0x58] sm:$0xff]
    %v94 = vld [vmem:[#allocation4 + $0x60] sm:$0xff]
    %v95 = vld [vmem:[#allocation4 + $0x68] sm:$0xff]
    %v96 = vld [vmem:[#allocation4 + $0x70] sm:$0xff]
    %v97 = vld [vmem:[#allocation4 + $0x78] sm:$0xff]
    %v98 = vld [vmem:[#allocation4 + $0x80] sm:$0xff]
    %v99 = vld [vmem:[#allocation4 + $0x88] sm:$0xff]
    %v100 = vld [vmem:[#allocation4 + $0x90] sm:$0xff]
    %v101 = vld [vmem:[#allocation4 + $0x98] sm:$0xff]
    %v102 = vld [vmem:[#allocation4 + $0xa0] sm:$0xff]
    %v103 = vld [vmem:[#allocation4 + $0xa8] sm:$0xff]
    %v104 = vld [vmem:[#allocation4 + $0xb0] sm:$0xff]
    %v105 = vld [vmem:[#allocation4 + $0xb8] sm:$0xff]
    %v106 = vld [vmem:[#allocation4 + $0xc0] sm:$0xff]
    %v107 = vld [vmem:[#allocation4 + $0xc8] sm:$0xff]
    %v108 = vld [vmem:[#allocation4 + $0xd0] sm:$0xff]
    %v109 = vld [vmem:[#allocation4 + $0xd8] sm:$0xff]
    %v110 = vld [vmem:[#allocation4 + $0xe0] sm:$0xff]
    %v111 = vld [vmem:[#allocation4 + $0xe8] sm:$0xff]
    %v112 = vld [vmem:[#allocation4 + $0xf0] sm:$0xff]
    %v113 = vld [vmem:[#allocation4 + $0xf8] sm:$0xff]
    %v118 = vunpack.c.l.b16 %v70
    %v119 = vunpack.c.h.b16 %v70
    %v120 = vunpack.c.l.b16 %v71
    %v121 = vunpack.c.h.b16 %v71
    %v122 = vunpack.c.l.b16 %v72
    %v123 = vunpack.c.h.b16 %v72
    %v124 = vunpack.c.l.b16 %v73
    %v125 = vunpack.c.h.b16 %v73
    %v126 = vpack.c.b16 %v120, %v118
    %v127 = vpack.c.b16 %v121, %v119
    %v128 = vpack.c.b16 %v124, %v122
    %v129 = vpack.c.b16 %v125, %v123
    %v166 = vunpack.c.l.b16 %v82
    %v167 = vunpack.c.h.b16 %v82
    %v168 = vunpack.c.l.b16 %v83
    %v169 = vunpack.c.h.b16 %v83
    %v170 = vunpack.c.l.b16 %v84
    %v171 = vunpack.c.h.b16 %v84
    %v172 = vunpack.c.l.b16 %v85
    %v173 = vunpack.c.h.b16 %v85
    %v174 = vunpack.c.l.b16 %v86
    %v175 = vunpack.c.h.b16 %v86
    %v176 = vunpack.c.l.b16 %v87
    %v177 = vunpack.c.h.b16 %v87
    %v178 = vunpack.c.l.b16 %v88
    %v179 = vunpack.c.h.b16 %v88
    %v180 = vunpack.c.l.b16 %v89
    %v181 = vunpack.c.h.b16 %v89
    %v182 = vunpack.c.l.b16 %v90
    %v183 = vunpack.c.h.b16 %v90
    %v184 = vunpack.c.l.b16 %v91
    %v185 = vunpack.c.h.b16 %v91
    %v186 = vunpack.c.l.b16 %v92
    %v187 = vunpack.c.h.b16 %v92
    %v188 = vunpack.c.l.b16 %v93
    %v189 = vunpack.c.h.b16 %v93
    %v190 = vunpack.c.l.b16 %v94
    %v191 = vunpack.c.h.b16 %v94
    %v192 = vunpack.c.l.b16 %v95
    %v193 = vunpack.c.h.b16 %v95
    %v194 = vunpack.c.l.b16 %v96
    %v195 = vunpack.c.h.b16 %v96
    %v196 = vunpack.c.l.b16 %v97
    %v197 = vunpack.c.h.b16 %v97
    %v198 = vunpack.c.l.b16 %v98
    %v199 = vunpack.c.h.b16 %v98
    %v200 = vunpack.c.l.b16 %v99
    %v201 = vunpack.c.h.b16 %v99
    %v202 = vunpack.c.l.b16 %v100
    %v203 = vunpack.c.h.b16 %v100
    %v204 = vunpack.c.l.b16 %v101
    %v205 = vunpack.c.h.b16 %v101
    %v206 = vunpack.c.l.b16 %v102
    %v207 = vunpack.c.h.b16 %v102
    %v208 = vunpack.c.l.b16 %v103
    %v209 = vunpack.c.h.b16 %v103
    %v210 = vunpack.c.l.b16 %v104
    %v211 = vunpack.c.h.b16 %v104
    %v212 = vunpack.c.l.b16 %v105
    %v213 = vunpack.c.h.b16 %v105
    %v214 = vunpack.c.l.b16 %v106
    %v215 = vunpack.c.h.b16 %v106
    %v216 = vunpack.c.l.b16 %v107
    %v217 = vunpack.c.h.b16 %v107
    %v218 = vunpack.c.l.b16 %v108
    %v219 = vunpack.c.h.b16 %v108
    %v220 = vunpack.c.l.b16 %v109
    %v221 = vunpack.c.h.b16 %v109
    %v222 = vunpack.c.l.b16 %v110
    %v223 = vunpack.c.h.b16 %v110
    %v224 = vunpack.c.l.b16 %v111
    %v225 = vunpack.c.h.b16 %v111
    %v226 = vunpack.c.l.b16 %v112
    %v227 = vunpack.c.h.b16 %v112
    %v228 = vunpack.c.l.b16 %v113
    %v229 = vunpack.c.h.b16 %v113
    %v230 = vpack.c.b16 %v168, %v166
    %v231 = vpack.c.b16 %v169, %v167
    %v232 = vpack.c.b16 %v172, %v170
    %v233 = vpack.c.b16 %v173, %v171
    %v234 = vpack.c.b16 %v176, %v174
    %v235 = vpack.c.b16 %v177, %v175
    %v236 = vpack.c.b16 %v180, %v178
    %v237 = vpack.c.b16 %v181, %v179
    %v238 = vpack.c.b16 %v184, %v182
    %v239 = vpack.c.b16 %v185, %v183
    %v240 = vpack.c.b16 %v188, %v186
    %v241 = vpack.c.b16 %v189, %v187
    %v242 = vpack.c.b16 %v192, %v190
    %v243 = vpack.c.b16 %v193, %v191
    %v244 = vpack.c.b16 %v196, %v194
    %v245 = vpack.c.b16 %v197, %v195
    %v246 = vpack.c.b16 %v200, %v198
    %v247 = vpack.c.b16 %v201, %v199
    %v248 = vpack.c.b16 %v204, %v202
    %v249 = vpack.c.b16 %v205, %v203
    %v250 = vpack.c.b16 %v208, %v206
    %v251 = vpack.c.b16 %v209, %v207
    %v252 = vpack.c.b16 %v212, %v210
    %v253 = vpack.c.b16 %v213, %v211
    %v254 = vpack.c.b16 %v216, %v214
    %v255 = vpack.c.b16 %v217, %v215
    %v256 = vpack.c.b16 %v220, %v218
    %v257 = vpack.c.b16 %v221, %v219
    %v258 = vpack.c.b16 %v224, %v222
    %v259 = vpack.c.b16 %v225, %v223
    %v260 = vpack.c.b16 %v228, %v226
    %v261 = vpack.c.b16 %v229, %v227
    %294 = vmatprep.subr.bf16.mxu0 %v231
    %295 = vmatpush1.bf16.msra.mxu0 %v230
    %296 = vmatprep.subr.bf16.mxu0 %v233
    %297 = vmatpush1.bf16.msra.mxu0 %v232
    %298 = vmatprep.subr.bf16.mxu0 %v235
    %299 = vmatpush1.bf16.msra.mxu0 %v234
    %300 = vmatprep.subr.bf16.mxu0 %v237
    %301 = vmatpush1.bf16.msra.mxu0 %v236
    %302 = vmatprep.subr.bf16.mxu0 %v239
    %303 = vmatpush1.bf16.msra.mxu0 %v238
    %304 = vmatprep.subr.bf16.mxu0 %v241
    %305 = vmatpush1.bf16.msra.mxu0 %v240
    %306 = vmatprep.subr.bf16.mxu0 %v243
    %307 = vmatpush1.bf16.msra.mxu0 %v242
    %308 = vmatprep.subr.bf16.mxu0 %v245
    %309 = vmatpush1.bf16.msra.mxu0 %v244
    %310 = vmatprep.subr.bf16.mxu0 %v247
    %311 = vmatpush1.bf16.msra.mxu0 %v246
    %312 = vmatprep.subr.bf16.mxu0 %v249
    %313 = vmatpush1.bf16.msra.mxu0 %v248
    %314 = vmatprep.subr.bf16.mxu0 %v251
    %315 = vmatpush1.bf16.msra.mxu0 %v250
    %316 = vmatprep.subr.bf16.mxu0 %v253
    %317 = vmatpush1.bf16.msra.mxu0 %v252
    %318 = vmatprep.subr.bf16.mxu0 %v255
    %319 = vmatpush1.bf16.msra.mxu0 %v254
    %320 = vmatprep.subr.bf16.mxu0 %v257
    %321 = vmatpush1.bf16.msra.mxu0 %v256
    %322 = vmatprep.subr.bf16.mxu0 %v259
    %323 = vmatpush1.bf16.msra.mxu0 %v258
    %324 = vmatprep.subr.bf16.mxu0 %v261
    %325 = vmatpush1.bf16.msra.mxu0 %v260
    %326 = vmatprep.mubr.bf16.mxu0 %v127
    %327 = vmatmul.mubr.bf16.gmra.mrb[0].mxu0 %v126
    %v328 = vpop.f32.mrb[0].mxu0
    %v329 = vadd.f32 0.0, %v328
    %v330 = vpop.f32.mrb[0].mxu0
    %v331 = vadd.f32 0.0, %v330
    %v332 = vpop.f32.mrb[0].mxu0
    %v333 = vadd.f32 0.0, %v332
    %v334 = vpop.f32.mrb[0].mxu0
    %v335 = vadd.f32 0.0, %v334
    %336 = vmatprep.mubr.bf16.mxu0 %v129
    %337 = vmatmul.mubr.bf16.gmra.mrb[0].mxu0 %v128
    %v338 = vpop.f32.mrb[0].mxu0
    %v339 = vadd.f32 0.0, %v338
    %v340 = vpop.f32.mrb[0].mxu0
    %v341 = vadd.f32 0.0, %v340
    %v342 = vpop.f32.mrb[0].mxu0
    %v343 = vadd.f32 0.0, %v342
    %v344 = vpop.f32.mrb[0].mxu0
    %v345 = vadd.f32 0.0, %v344
    %346 = vdwg.mxu0
    %v347 = vadd.f32 %v74, %v329
    %v348 = vadd.f32 %v75, %v331
    %v349 = vadd.f32 %v76, %v333
    %v350 = vadd.f32 %v77, %v335
    %v351 = vadd.f32 %v78, %v339
    %v352 = vadd.f32 %v79, %v341
    %v353 = vadd.f32 %v80, %v343
    %v354 = vadd.f32 %v81, %v345
    %355 = vst [vmem:[#allocation2] sm:$0xff] %v347
    %356 = vst [vmem:[#allocation2 + $0x8] sm:$0xff] %v348
    %357 = vst [vmem:[#allocation2 + $0x10] sm:$0xff] %v349
    %358 = vst [vmem:[#allocation2 + $0x18] sm:$0xff] %v350
    %359 = vst [vmem:[#allocation2 + $0x20] sm:$0xff] %v351
    %360 = vst [vmem:[#allocation2 + $0x28] sm:$0xff] %v352
    %361 = vst [vmem:[#allocation2 + $0x30] sm:$0xff] %v353
    %362 = vst [vmem:[#allocation2 + $0x38] sm:$0xff] %v354
    %v363 = vld [vmem:[#allocation3] sm:$0xff]
    %v364 = vld [vmem:[#allocation3 + $0x8] sm:$0xff]
    %v365 = vld [vmem:[#allocation3 + $0x10] sm:$0xff]
    %v366 = vld [vmem:[#allocation3 + $0x18] sm:$0xff]
    %v367 = vld [vmem:[#allocation3 + $0x20] sm:$0xff]
    %v368 = vld [vmem:[#allocation3 + $0x28] sm:$0xff]
    %v369 = vld [vmem:[#allocation3 + $0x30] sm:$0xff]
    %v370 = vld [vmem:[#allocation3 + $0x38] sm:$0xff]
    %v371 = vld [vmem:[#allocation6] sm:$0xff]
    %v372 = vld [vmem:[#allocation6 + $0x8] sm:$0xff]
    %v373 = vld [vmem:[#allocation6 + $0x10] sm:$0xff]
    %v374 = vld [vmem:[#allocation6 + $0x18] sm:$0xff]
    %v375 = vld [vmem:[#allocation6 + $0x20] sm:$0xff]
    %v376 = vld [vmem:[#allocation6 + $0x28] sm:$0xff]
    %v377 = vld [vmem:[#allocation6 + $0x30] sm:$0xff]
    %v378 = vld [vmem:[#allocation6 + $0x38] sm:$0xff]
    %v379 = vld [vmem:[#allocation6 + $0x40] sm:$0xff]
    %v380 = vld [vmem:[#allocation6 + $0x48] sm:$0xff]
    %v381 = vld [vmem:[#allocation6 + $0x50] sm:$0xff]
    %v382 = vld [vmem:[#allocation6 + $0x58] sm:$0xff]
    %v383 = vld [vmem:[#allocation6 + $0x60] sm:$0xff]
    %v384 = vld [vmem:[#allocation6 + $0x68] sm:$0xff]
    %v385 = vld [vmem:[#allocation6 + $0x70] sm:$0xff]
    %v386 = vld [vmem:[#allocation6 + $0x78] sm:$0xff]
    %v387 = vld [vmem:[#allocation6 + $0x80] sm:$0xff]
    %v388 = vld [vmem:[#allocation6 + $0x88] sm:$0xff]
    %v389 = vld [vmem:[#allocation6 + $0x90] sm:$0xff]
    %v390 = vld [vmem:[#allocation6 + $0x98] sm:$0xff]
    %v391 = vld [vmem:[#allocation6 + $0xa0] sm:$0xff]
    %v392 = vld [vmem:[#allocation6 + $0xa8] sm:$0xff]
    %v393 = vld [vmem:[#allocation6 + $0xb0] sm:$0xff]
    %v394 = vld [vmem:[#allocation6 + $0xb8] sm:$0xff]
    %v395 = vld [vmem:[#allocation6 + $0xc0] sm:$0xff]
    %v396 = vld [vmem:[#allocation6 + $0xc8] sm:$0xff]
    %v397 = vld [vmem:[#allocation6 + $0xd0] sm:$0xff]
    %v398 = vld [vmem:[#allocation6 + $0xd8] sm:$0xff]
    %v399 = vld [vmem:[#allocation6 + $0xe0] sm:$0xff]
    %v400 = vld [vmem:[#allocation6 + $0xe8] sm:$0xff]
    %v401 = vld [vmem:[#allocation6 + $0xf0] sm:$0xff]
    %v402 = vld [vmem:[#allocation6 + $0xf8] sm:$0xff]
    %v435 = vunpack.c.l.b16 %v371
    %v436 = vunpack.c.h.b16 %v371
    %v437 = vunpack.c.l.b16 %v372
    %v438 = vunpack.c.h.b16 %v372
    %v439 = vunpack.c.l.b16 %v373
    %v440 = vunpack.c.h.b16 %v373
    %v441 = vunpack.c.l.b16 %v374
    %v442 = vunpack.c.h.b16 %v374
    %v443 = vunpack.c.l.b16 %v375
    %v444 = vunpack.c.h.b16 %v375
    %v445 = vunpack.c.l.b16 %v376
    %v446 = vunpack.c.h.b16 %v376
    %v447 = vunpack.c.l.b16 %v377
    %v448 = vunpack.c.h.b16 %v377
    %v449 = vunpack.c.l.b16 %v378
    %v450 = vunpack.c.h.b16 %v378
    %v451 = vunpack.c.l.b16 %v379
    %v452 = vunpack.c.h.b16 %v379
    %v453 = vunpack.c.l.b16 %v380
    %v454 = vunpack.c.h.b16 %v380
    %v455 = vunpack.c.l.b16 %v381
    %v456 = vunpack.c.h.b16 %v381
    %v457 = vunpack.c.l.b16 %v382
    %v458 = vunpack.c.h.b16 %v382
    %v459 = vunpack.c.l.b16 %v383
    %v460 = vunpack.c.h.b16 %v383
    %v461 = vunpack.c.l.b16 %v384
    %v462 = vunpack.c.h.b16 %v384
    %v463 = vunpack.c.l.b16 %v385
    %v464 = vunpack.c.h.b16 %v385
    %v465 = vunpack.c.l.b16 %v386
    %v466 = vunpack.c.h.b16 %v386
    %v467 = vunpack.c.l.b16 %v387
    %v468 = vunpack.c.h.b16 %v387
    %v469 = vunpack.c.l.b16 %v388
    %v470 = vunpack.c.h.b16 %v388
    %v471 = vunpack.c.l.b16 %v389
    %v472 = vunpack.c.h.b16 %v389
    %v473 = vunpack.c.l.b16 %v390
    %v474 = vunpack.c.h.b16 %v390
    %v475 = vunpack.c.l.b16 %v391
    %v476 = vunpack.c.h.b16 %v391
    %v477 = vunpack.c.l.b16 %v392
    %v478 = vunpack.c.h.b16 %v392
    %v479 = vunpack.c.l.b16 %v393
    %v480 = vunpack.c.h.b16 %v393
    %v481 = vunpack.c.l.b16 %v394
    %v482 = vunpack.c.h.b16 %v394
    %v483 = vunpack.c.l.b16 %v395
    %v484 = vunpack.c.h.b16 %v395
    %v485 = vunpack.c.l.b16 %v396
    %v486 = vunpack.c.h.b16 %v396
    %v487 = vunpack.c.l.b16 %v397
    %v488 = vunpack.c.h.b16 %v397
    %v489 = vunpack.c.l.b16 %v398
    %v490 = vunpack.c.h.b16 %v398
    %v491 = vunpack.c.l.b16 %v399
    %v492 = vunpack.c.h.b16 %v399
    %v493 = vunpack.c.l.b16 %v400
    %v494 = vunpack.c.h.b16 %v400
    %v495 = vunpack.c.l.b16 %v401
    %v496 = vunpack.c.h.b16 %v401
    %v497 = vunpack.c.l.b16 %v402
    %v498 = vunpack.c.h.b16 %v402
    %v499 = vpack.c.b16 %v437, %v435
    %v500 = vpack.c.b16 %v438, %v436
    %v501 = vpack.c.b16 %v441, %v439
    %v502 = vpack.c.b16 %v442, %v440
    %v503 = vpack.c.b16 %v445, %v443
    %v504 = vpack.c.b16 %v446, %v444
    %v505 = vpack.c.b16 %v449, %v447
    %v506 = vpack.c.b16 %v450, %v448
    %v507 = vpack.c.b16 %v453, %v451
    %v508 = vpack.c.b16 %v454, %v452
    %v509 = vpack.c.b16 %v457, %v455
    %v510 = vpack.c.b16 %v458, %v456
    %v511 = vpack.c.b16 %v461, %v459
    %v512 = vpack.c.b16 %v462, %v460
    %v513 = vpack.c.b16 %v465, %v463
    %v514 = vpack.c.b16 %v466, %v464
    %v515 = vpack.c.b16 %v469, %v467
    %v516 = vpack.c.b16 %v470, %v468
    %v517 = vpack.c.b16 %v473, %v471
    %v518 = vpack.c.b16 %v474, %v472
    %v519 = vpack.c.b16 %v477, %v475
    %v520 = vpack.c.b16 %v478, %v476
    %v521 = vpack.c.b16 %v481, %v479
    %v522 = vpack.c.b16 %v482, %v480
    %v523 = vpack.c.b16 %v485, %v483
    %v524 = vpack.c.b16 %v486, %v484
    %v525 = vpack.c.b16 %v489, %v487
    %v526 = vpack.c.b16 %v490, %v488
    %v527 = vpack.c.b16 %v493, %v491
    %v528 = vpack.c.b16 %v494, %v492
    %v529 = vpack.c.b16 %v497, %v495
    %v530 = vpack.c.b16 %v498, %v496
    %563 = vmatprep.subr.bf16.mxu0 %v500
    %564 = vmatpush1.bf16.msra.mxu0 %v499
    %565 = vmatprep.subr.bf16.mxu0 %v502
    %566 = vmatpush1.bf16.msra.mxu0 %v501
    %567 = vmatprep.subr.bf16.mxu0 %v504
    %568 = vmatpush1.bf16.msra.mxu0 %v503
    %569 = vmatprep.subr.bf16.mxu0 %v506
    %570 = vmatpush1.bf16.msra.mxu0 %v505
    %571 = vmatprep.subr.bf16.mxu0 %v508
    %572 = vmatpush1.bf16.msra.mxu0 %v507
    %573 = vmatprep.subr.bf16.mxu0 %v510
    %574 = vmatpush1.bf16.msra.mxu0 %v509
    %575 = vmatprep.subr.bf16.mxu0 %v512
    %576 = vmatpush1.bf16.msra.mxu0 %v511
    %577 = vmatprep.subr.bf16.mxu0 %v514
    %578 = vmatpush1.bf16.msra.mxu0 %v513
    %579 = vmatprep.subr.bf16.mxu0 %v516
    %580 = vmatpush1.bf16.msra.mxu0 %v515
    %581 = vmatprep.subr.bf16.mxu0 %v518
    %582 = vmatpush1.bf16.msra.mxu0 %v517
    %583 = vmatprep.subr.bf16.mxu0 %v520
    %584 = vmatpush1.bf16.msra.mxu0 %v519
    %585 = vmatprep.subr.bf16.mxu0 %v522
    %586 = vmatpush1.bf16.msra.mxu0 %v521
    %587 = vmatprep.subr.bf16.mxu0 %v524
    %588 = vmatpush1.bf16.msra.mxu0 %v523
    %589 = vmatprep.subr.bf16.mxu0 %v526
    %590 = vmatpush1.bf16.msra.mxu0 %v525
    %591 = vmatprep.subr.bf16.mxu0 %v528
    %592 = vmatpush1.bf16.msra.mxu0 %v527
    %593 = vmatprep.subr.bf16.mxu0 %v530
    %594 = vmatpush1.bf16.msra.mxu0 %v529
    %595 = vmatprep.mubr.bf16.mxu0 %v127
    %596 = vmatmul.mubr.bf16.gmra.mrb[0].mxu0 %v126
    %v597 = vpop.f32.mrb[0].mxu0
    %v598 = vadd.f32 0.0, %v597
    %v599 = vpop.f32.mrb[0].mxu0
    %v600 = vadd.f32 0.0, %v599
    %v601 = vpop.f32.mrb[0].mxu0
    %v602 = vadd.f32 0.0, %v601
    %v603 = vpop.f32.mrb[0].mxu0
    %v604 = vadd.f32 0.0, %v603
    %605 = vmatprep.mubr.bf16.mxu0 %v129
    %606 = vmatmul.mubr.bf16.gmra.mrb[0].mxu0 %v128
    %v607 = vpop.f32.mrb[0].mxu0
    %v608 = vadd.f32 0.0, %v607
    %v609 = vpop.f32.mrb[0].mxu0
    %v610 = vadd.f32 0.0, %v609
    %v611 = vpop.f32.mrb[0].mxu0
    %v612 = vadd.f32 0.0, %v611
    %v613 = vpop.f32.mrb[0].mxu0
    %v614 = vadd.f32 0.0, %v613
    %615 = vdwg.mxu0
    %v616 = vadd.f32 %v363, %v598
    %v617 = vadd.f32 %v364, %v600
    %v618 = vadd.f32 %v365, %v602
    %v619 = vadd.f32 %v366, %v604
    %v620 = vadd.f32 %v367, %v608
    %v621 = vadd.f32 %v368, %v610
    %v622 = vadd.f32 %v369, %v612
    %v623 = vadd.f32 %v370, %v614
    %624 = vst [vmem:[#allocation3] sm:$0xff] %v616
    %625 = vst [vmem:[#allocation3 + $0x8] sm:$0xff] %v617
    %626 = vst [vmem:[#allocation3 + $0x10] sm:$0xff] %v618
    %627 = vst [vmem:[#allocation3 + $0x18] sm:$0xff] %v619
    %628 = vst [vmem:[#allocation3 + $0x20] sm:$0xff] %v620
    %629 = vst [vmem:[#allocation3 + $0x28] sm:$0xff] %v621
    %630 = vst [vmem:[#allocation3 + $0x30] sm:$0xff] %v622
    %631 = vst [vmem:[#allocation3 + $0x38] sm:$0xff] %v623
    // Predicated region
    $region34: #{ring_cross_attention_forward.5} parent=1 // pred_check
      %p632 = pneg %p50
    $region35: #{ring_cross_attention_forward.5} parent=1 // pred_check_branch
      %634 = sbr.rel (%p632) target = $region37
    $region36: #{ring_cross_attention_forward.5} parent=1 // pred_region
      %v635 = vld [vmem:[#allocation2] sm:$0xff]
      %v636 = vld [vmem:[#allocation2 + $0x8] sm:$0xff]
      %v637 = vld [vmem:[#allocation2 + $0x10] sm:$0xff]
      %v638 = vld [vmem:[#allocation2 + $0x18] sm:$0xff]
      %v639 = vld [vmem:[#allocation2 + $0x20] sm:$0xff]
      %v640 = vld [vmem:[#allocation2 + $0x28] sm:$0xff]
      %v641 = vld [vmem:[#allocation2 + $0x30] sm:$0xff]
      %v642 = vld [vmem:[#allocation2 + $0x38] sm:$0xff]
      %v643 = vld [vmem:[%s3] sm:$0x3]
      %v645 = vlaneseq
      %v646 = vshrl.u32 %v645, 7
      %v647 = vsub.s32 0, %v646
      %v648 = vrot.slane %v643, %v647
      %v649 = vlaneseq
      %v650 = vshrl.u32 %v649, 7
      %v651 = vsub.s32 1, %v650
      %v652 = vrot.slane %v643, %v651
      %v655 = vadd.f32 %v635, %v648
      %v656 = vadd.f32 %v636, %v652
      %v657 = vadd.f32 %v637, %v648
      %v658 = vadd.f32 %v638, %v652
      %v659 = vadd.f32 %v639, %v648
      %v660 = vadd.f32 %v640, %v652
      %v661 = vadd.f32 %v641, %v648
      %v662 = vadd.f32 %v642, %v652
      %v663 = vpack.c.bf16 %v657, %v655
      %v664 = vpack.c.bf16 %v658, %v656
      %v665 = vpack.c.bf16 %v661, %v659
      %v666 = vpack.c.bf16 %v662, %v660
      %v671 = vunpack.c.l.b16 %v663
      %v672 = vunpack.c.l.b16 %v664
      %v673 = vunpack.c.h.b16 %v663
      %v674 = vunpack.c.h.b16 %v664
      %v675 = vunpack.c.l.b16 %v665
      %v676 = vunpack.c.l.b16 %v666
      %v677 = vunpack.c.h.b16 %v665
      %v678 = vunpack.c.h.b16 %v666
      %v679 = vpack.c.b16 %v672, %v671
      %v680 = vpack.c.b16 %v674, %v673
      %v681 = vpack.c.b16 %v676, %v675
      %v682 = vpack.c.b16 %v678, %v677
      %687 = vst [vmem:[%s5] sm:$0xff] %v679
      %688 = vst [vmem:[%s5 + $0x8] sm:$0xff] %v680
      %689 = vst [vmem:[%s5 + $0x10] sm:$0xff] %v681
      %690 = vst [vmem:[%s5 + $0x18] sm:$0xff] %v682
      %v691 = vld [vmem:[#allocation3] sm:$0xff]
      %v692 = vld [vmem:[#allocation3 + $0x8] sm:$0xff]
      %v693 = vld [vmem:[#allocation3 + $0x10] sm:$0xff]
      %v694 = vld [vmem:[#allocation3 + $0x18] sm:$0xff]
      %v695 = vld [vmem:[#allocation3 + $0x20] sm:$0xff]
      %v696 = vld [vmem:[#allocation3 + $0x28] sm:$0xff]
      %v697 = vld [vmem:[#allocation3 + $0x30] sm:$0xff]
      %v698 = vld [vmem:[#allocation3 + $0x38] sm:$0xff]
      %v699 = vld [vmem:[%s4] sm:$0x3]
      %v701 = vlaneseq
      %v702 = vshrl.u32 %v701, 7
      %v703 = vsub.s32 0, %v702
      %v704 = vrot.slane %v699, %v703
      %v705 = vlaneseq
      %v706 = vshrl.u32 %v705, 7
      %v707 = vsub.s32 1, %v706
      %v708 = vrot.slane %v699, %v707
      %v711 = vadd.f32 %v691, %v704
      %v712 = vadd.f32 %v692, %v708
      %v713 = vadd.f32 %v693, %v704
      %v714 = vadd.f32 %v694, %v708
      %v715 = vadd.f32 %v695, %v704
      %v716 = vadd.f32 %v696, %v708
      %v717 = vadd.f32 %v697, %v704
      %v718 = vadd.f32 %v698, %v708
      %v719 = vpack.c.bf16 %v713, %v711
      %v720 = vpack.c.bf16 %v714, %v712
      %v721 = vpack.c.bf16 %v717, %v715
      %v722 = vpack.c.bf16 %v718, %v716
      %v727 = vunpack.c.l.b16 %v719
      %v728 = vunpack.c.l.b16 %v720
      %v729 = vunpack.c.h.b16 %v719
      %v730 = vunpack.c.h.b16 %v720
      %v731 = vunpack.c.l.b16 %v721
      %v732 = vunpack.c.l.b16 %v722
      %v733 = vunpack.c.h.b16 %v721
      %v734 = vunpack.c.h.b16 %v722
      %v735 = vpack.c.b16 %v728, %v727
      %v736 = vpack.c.b16 %v730, %v729
      %v737 = vpack.c.b16 %v732, %v731
      %v738 = vpack.c.b16 %v734, %v733
      %743 = vst [vmem:[%s6] sm:$0xff] %v735
      %744 = vst [vmem:[%s6 + $0x8] sm:$0xff] %v736
      %745 = vst [vmem:[%s6 + $0x10] sm:$0xff] %v737
      %746 = vst [vmem:[%s6 + $0x18] sm:$0xff] %v738
    $region37: #{ring_cross_attention_forward.5} parent=1 // pred_fallthru
      _
    // Predicated region
    $region38: #{ring_cross_attention_forward.5} parent=1 // pred_check
      _
    $region39: #{ring_cross_attention_forward.5} parent=1 // pred_check_branch
      %748 = sbr.rel (0) target = $region41
    $region40: #{ring_cross_attention_forward.5} parent=1 // pred_region
      _
    $region41: #{ring_cross_attention_forward.5} parent=1 // pred_fallthru
      _
    // Predicated region
    $region42: #{ring_cross_attention_forward.5} parent=1 // pred_check
      _
    $region43: #{ring_cross_attention_forward.5} parent=1 // pred_check_branch
      %750 = sbr.rel (0) target = $region45
    $region44: #{ring_cross_attention_forward.5} parent=1 // pred_region
      _
    $region45: #{ring_cross_attention_forward.5} parent=1 // pred_fallthru
      _
    // Predicated region
    $region46: #{ring_cross_attention_forward.5} parent=1 // pred_check
      _
    $region47: #{ring_cross_attention_forward.5} parent=1 // pred_check_branch
      %752 = sbr.rel (0) target = $region49
    $region48: #{ring_cross_attention_forward.5} parent=1 // pred_region
      _
    $region49: #{ring_cross_attention_forward.5} parent=1 // pred_fallthru
      _
    // Predicated region
    $region50: #{ring_cross_attention_forward.5} parent=1 // pred_check
      _
    $region51: #{ring_cross_attention_forward.5} parent=1 // pred_check_branch
      %754 = sbr.rel (0) target = $region53
    $region52: #{ring_cross_attention_forward.5} parent=1 // pred_region
      _
    $region53: #{ring_cross_attention_forward.5} parent=1 // pred_fallthru
      _
    %755 = vsyncpa [#allocation5], 1
    %756 = vsyncpa [#allocation7], 1

// kernel: ring_cross_attention_forward.6
$region0: #{ring_cross_attention_forward.6}
  #allocation0 [shape = 'u32[]', space=smem, size = 0x4, offset = 0x4, fixed_abs, tag = 'smem constant byte address 0x4 - core index']
  #allocation1 [shape = 'u32[144,128]{1,0:T(1,128)}', space=vmem, size = 0x12000, scoped, tag = 'internal scratch']
  #allocation2 [shape = 'f32[8,2]{1,0:T(8,128)}', space=vmem, size = 0x1000, scoped, tag = 'scratch operand']
  #allocation3 [shape = 'f32[8,2]{1,0:T(8,128)}', space=vmem, size = 0x1000, scoped, tag = 'scratch operand']
  #allocation4 [shape = 'f32[8,256]{1,0:T(8,128)}', space=vmem, size = 0x2000, scoped, tag = 'scratch operand']
  %s0 = inlined_call_operand.vmem [shape: bf16[2,8,256], index: 0, kind: input, shape index: {}]
  %s1 = inlined_call_operand.vmem [shape: bf16[2,16,256], index: 1, kind: input, shape index: {}]
  %s2 = inlined_call_operand.vmem [shape: bf16[2,16,256], index: 2, kind: input, shape index: {}]
  %s3 = inlined_call_operand.vmem [shape: bf16[2,8,256], index: 3, kind: output, shape index: {}]
  %s4 = sld [smem:[#allocation0]]
  $region53: #{ring_cross_attention_forward.6} parent=0
    _
  %s6 = ssub.s32 1, %s4
  %s7 = scalar_select 0, %s6, %s4
  loop: start=0, step=1, limit=4
  $region2: #{ring_cross_attention_forward.6} parent=0 // loop_pre_header
    _
  $region3: #{ring_cross_attention_forward.6} parent=0 // loop_header
    %s9 = sphi 0, %s13
    %p10 = scmp.ge.s32.totalorder %s9, 4
    %s16 = sphi 0, %s35
    %s17 = sphi 0, %s31
    %s18 = sphi 0, %s27
    %s19 = sphi 0, %s16
    %s20 = sphi 0, %s17
    %s21 = sphi 0, %s18
    %s22 = sphi 0, %s19
    %s23 = sphi 0, %s20
    %s24 = sphi 0, %s21
    %s40 = sphi 0, %s42
    %s43 = sphi 0, %s40
    %s44 = sphi 0, %s43
    %s60 = sphi 0, %s44
    %s68 = sphi 0, %s70
    %s71 = sphi 0, %s68
    %s72 = sphi 0, %s71
    %s88 = sphi 0, %s72
    %s96 = sphi 0, %s98
    %s99 = sphi 0, %s96
    %s100 = sphi 0, %s99
    %s116 = sphi 0, %s100
    %s124 = sphi 0, %s126
    %s127 = sphi 0, %s124
    %s128 = sphi 0, %s127
    %s144 = sphi 0, %s128
  $region4: #{ring_cross_attention_forward.6} parent=0 // loop_header_branch
    %12 = sbr.rel (%p10) target = $region8
  $region5: #{ring_cross_attention_forward.6} parent=0 // loop_body
    %s14 = ssub.s32 %s9, 1
    %s15 = ssub.s32 %s9, 2
    %s25 = sadd.s32 1, %s18
    %p26 = scmp.ge.s32.totalorder %s25, 1
    %s27 = scalar_select %p26, 0, %s25
    %s28 = sadd.s32 1, %s17
    %s29 = scalar_select %p26, %s28, %s17
    %p30 = scmp.ge.s32.totalorder %s29, 1
    %s31 = scalar_select %p30, 0, %s29
    %s32 = sadd.s32 1, %s16
    %s33 = scalar_select %p30, %s32, %s16
    %p34 = scmp.ge.s32.totalorder %s33, 2
    %s35 = scalar_select %p34, 0, %s33
    %s36 = ssub.s32 %s16, %s35
    %s37 = ssub.s32 %s17, %s31
    %s38 = sor.u32 %s36, %s37
    %p39 = scmp.eq.s32.totalorder %s38, 0
    %s41 = sadd.s32 %s40, 1
    %s42 = scalar_select %p39, %s40, %s41
    %p45 = pneg %p39
    %p46 = scmp.eq.s32.totalorder %s9, 1
    %p47 = por %p45, %p46
    %p48 = scmp.ne.s32.totalorder %s40, %s43
    %p49 = scmp.eq.s32.totalorder %s9, 0
    %p50 = por %p48, %p49
    %p51 = scmp.ne.s32.totalorder %s40, %s43
    %p52 = scmp.eq.s32.totalorder %s14, 1
    %p53 = por %p51, %p52
    %p54 = scmp.ne.s32.totalorder %s43, %s44
    %p55 = scmp.eq.s32.totalorder %s14, 0
    %p56 = por %p54, %p55
    %p57 = scmp.ne.s32.totalorder %s43, %s44
    %p58 = scmp.eq.s32.totalorder %s15, 1
    %p59 = por %p57, %p58
    %p61 = scmp.ne.s32.totalorder %s44, %s60
    %p62 = scmp.eq.s32.totalorder %s15, 0
    %p63 = por %p61, %p62
    %s64 = ssub.s32 %s16, %s35
    %s65 = ssub.s32 %s18, %s27
    %s66 = sor.u32 %s64, %s65
    %p67 = scmp.eq.s32.totalorder %s66, 0
    %s69 = sadd.s32 %s68, 1
    %s70 = scalar_select %p67, %s68, %s69
    %p73 = pneg %p67
    %p74 = scmp.eq.s32.totalorder %s9, 1
    %p75 = por %p73, %p74
    %p76 = scmp.ne.s32.totalorder %s68, %s71
    %p77 = scmp.eq.s32.totalorder %s9, 0
    %p78 = por %p76, %p77
    %p79 = scmp.ne.s32.totalorder %s68, %s71
    %p80 = scmp.eq.s32.totalorder %s14, 1
    %p81 = por %p79, %p80
    %p82 = scmp.ne.s32.totalorder %s71, %s72
    %p83 = scmp.eq.s32.totalorder %s14, 0
    %p84 = por %p82, %p83
    %p85 = scmp.ne.s32.totalorder %s71, %s72
    %p86 = scmp.eq.s32.totalorder %s15, 1
    %p87 = por %p85, %p86
    %p89 = scmp.ne.s32.totalorder %s72, %s88
    %p90 = scmp.eq.s32.totalorder %s15, 0
    %p91 = por %p89, %p90
    %s92 = ssub.s32 %s16, %s35
    %s93 = ssub.s32 %s18, %s27
    %s94 = sor.u32 %s92, %s93
    %p95 = scmp.eq.s32.totalorder %s94, 0
    %s97 = sadd.s32 %s96, 1
    %s98 = scalar_select %p95, %s96, %s97
    %p101 = pneg %p95
    %p102 = scmp.eq.s32.totalorder %s9, 1
    %p103 = por %p101, %p102
    %p104 = scmp.ne.s32.totalorder %s96, %s99
    %p105 = scmp.eq.s32.totalorder %s9, 0
    %p106 = por %p104, %p105
    %p107 = scmp.ne.s32.totalorder %s96, %s99
    %p108 = scmp.eq.s32.totalorder %s14, 1
    %p109 = por %p107, %p108
    %p110 = scmp.ne.s32.totalorder %s99, %s100
    %p111 = scmp.eq.s32.totalorder %s14, 0
    %p112 = por %p110, %p111
    %p113 = scmp.ne.s32.totalorder %s99, %s100
    %p114 = scmp.eq.s32.totalorder %s15, 1
    %p115 = por %p113, %p114
    %p117 = scmp.ne.s32.totalorder %s100, %s116
    %p118 = scmp.eq.s32.totalorder %s15, 0
    %p119 = por %p117, %p118
    %s120 = ssub.s32 %s16, %s35
    %s121 = ssub.s32 %s17, %s31
    %s122 = sor.u32 %s120, %s121
    %p123 = scmp.eq.s32.totalorder %s122, 0
    %s125 = sadd.s32 %s124, 1
    %s126 = scalar_select %p123, %s124, %s125
    %p129 = pneg %p123
    %p130 = scmp.eq.s32.totalorder %s9, 1
    %p131 = por %p129, %p130
    %p132 = scmp.ne.s32.totalorder %s124, %s127
    %p133 = scmp.eq.s32.totalorder %s9, 0
    %p134 = por %p132, %p133
    %p135 = scmp.ne.s32.totalorder %s124, %s127
    %p136 = scmp.eq.s32.totalorder %s14, 1
    %p137 = por %p135, %p136
    %p138 = scmp.ne.s32.totalorder %s127, %s128
    %p139 = scmp.eq.s32.totalorder %s14, 0
    %p140 = por %p138, %p139
    %p141 = scmp.ne.s32.totalorder %s127, %s128
    %p142 = scmp.eq.s32.totalorder %s15, 1
    %p143 = por %p141, %p142
    %p145 = scmp.ne.s32.totalorder %s128, %s144
    %p146 = scmp.eq.s32.totalorder %s15, 0
    %p147 = por %p145, %p146
    %p148 = scmp.le.s32.totalorder 1, %s9
    %p149 = scmp.lt.s32.totalorder %s9, 3
    %p150 = pnand %p148, %p149
    %p151 = pneg %p150
    // Predicated region
    $region9: #{ring_cross_attention_forward.6} parent=5 // pred_check
      _
    $region10: #{ring_cross_attention_forward.6} parent=5 // pred_check_branch
      %153 = sbr.rel (%p150) target = $region12
    $region11: #{ring_cross_attention_forward.6} parent=5 // pred_region
      %s154 = ssub.s32 %s9, 1
    $region12: #{ring_cross_attention_forward.6} parent=5 // pred_fallthru
      _
    %p155 = scmp.lt.s32.totalorder %s9, 2
    // Predicated region
    $region13: #{ring_cross_attention_forward.6} parent=5 // pred_check
      %p156 = pneg %p155
    $region14: #{ring_cross_attention_forward.6} parent=5 // pred_check_branch
      %158 = sbr.rel (%p156) target = $region16
    $region15: #{ring_cross_attention_forward.6} parent=5 // pred_region
      // Predicated region
      $region17: #{ring_cross_attention_forward.6} parent=15 // pred_check
        %p159 = pneg %p50
      $region18: #{ring_cross_attention_forward.6} parent=15 // pred_check_branch
        %161 = sbr.rel (%p159) target = $region20
      $region19: #{ring_cross_attention_forward.6} parent=15 // pred_region
        %p162 = scmp.lt.s32.totalorder %s16, 1
        %s163 = scalar_select %p162, %s16, 1
        %p164 = scmp.lt.s32.totalorder %s17, 0
        %s165 = scalar_select %p164, %s17, 0
        %s166 = smul.addr %s165, 2
        %s167 = smul.addr %s163, 2
        %s168 = sadd.s32 %s166, %s167
        %s169 = smul.addr %s168, 4
        %s170 = scalar_lea.vmem %s0, %s169
      $region20: #{ring_cross_attention_forward.6} parent=15 // pred_fallthru
        _
      // Predicated region
      $region21: #{ring_cross_attention_forward.6} parent=15 // pred_check
        %p171 = pneg %p78
      $region22: #{ring_cross_attention_forward.6} parent=15 // pred_check_branch
        %173 = sbr.rel (%p171) target = $region24
      $region23: #{ring_cross_attention_forward.6} parent=15 // pred_region
        %s174 = smul.u32 2, %s18
        %p175 = scmp.lt.s32.totalorder %s16, 1
        %s176 = scalar_select %p175, %s16, 1
        %p177 = scmp.lt.s32.totalorder %s174, 1
        %s178 = scalar_select %p177, %s174, 1
        %s179 = smul.addr %s178, 2
        %s180 = smul.addr %s176, 4
        %s181 = sadd.s32 %s179, %s180
        %s182 = smul.addr %s181, 4
        %s183 = scalar_lea.vmem %s1, %s182
        %s184 = smul.u32 2, %s18
      $region24: #{ring_cross_attention_forward.6} parent=15 // pred_fallthru
        _
      // Predicated region
      $region25: #{ring_cross_attention_forward.6} parent=15 // pred_check
        %p185 = pneg %p106
      $region26: #{ring_cross_attention_forward.6} parent=15 // pred_check_branch
        %187 = sbr.rel (%p185) target = $region28
      $region27: #{ring_cross_attention_forward.6} parent=15 // pred_region
        %s188 = smul.u32 2, %s18
        %p189 = scmp.lt.s32.totalorder %s16, 1
        %s190 = scalar_select %p189, %s16, 1
        %p191 = scmp.lt.s32.totalorder %s188, 1
        %s192 = scalar_select %p191, %s188, 1
        %s193 = smul.addr %s192, 2
        %s194 = smul.addr %s190, 4
        %s195 = sadd.s32 %s193, %s194
        %s196 = smul.addr %s195, 4
        %s197 = scalar_lea.vmem %s2, %s196
        %s198 = smul.u32 2, %s18
      $region28: #{ring_cross_attention_forward.6} parent=15 // pred_fallthru
        _
    $region16: #{ring_cross_attention_forward.6} parent=5 // pred_fallthru
      _
    %p199 = scmp.le.s32.totalorder 1, %s9
    %p200 = scmp.lt.s32.totalorder %s9, 3
    %p201 = pnand %p199, %p200
    %p202 = pneg %p201
    // Predicated region
    $region29: #{ring_cross_attention_forward.6} parent=5 // pred_check
      _
    $region30: #{ring_cross_attention_forward.6} parent=5 // pred_check_branch
      %204 = sbr.rel (%p201) target = $region32
    $region31: #{ring_cross_attention_forward.6} parent=5 // pred_region
      %s205 = ssub.s32 %s9, 1
      %p206 = scmp.lt.s32.totalorder %s19, 1
      %s207 = scalar_select %p206, %s19, 1
      %p208 = scmp.lt.s32.totalorder %s20, 0
      %s209 = scalar_select %p208, %s20, 0
      %s210 = smul.addr %s209, 2
      %s211 = smul.addr %s207, 2
      %s212 = sadd.s32 %s210, %s211
      %s213 = smul.addr %s212, 4
      %s214 = scalar_lea.vmem %s0, %s213
      %p215 = pneg %p56
      %p216 = pneg %p53
      %s217 = smul.u32 2, %s21
      %p218 = scmp.lt.s32.totalorder %s19, 1
      %s219 = scalar_select %p218, %s19, 1
      %p220 = scmp.lt.s32.totalorder %s217, 1
      %s221 = scalar_select %p220, %s217, 1
      %s222 = smul.addr %s221, 2
      %s223 = smul.addr %s219, 4
      %s224 = sadd.s32 %s222, %s223
      %s225 = smul.addr %s224, 4
      %s226 = scalar_lea.vmem %s1, %s225
      %p227 = pneg %p84
      %p228 = pneg %p81
      %s229 = smul.u32 2, %s21
      %p230 = scmp.lt.s32.totalorder %s19, 1
      %s231 = scalar_select %p230, %s19, 1
      %p232 = scmp.lt.s32.totalorder %s229, 1
      %s233 = scalar_select %p232, %s229, 1
      %s234 = smul.addr %s233, 2
      %s235 = smul.addr %s231, 4
      %s236 = sadd.s32 %s234, %s235
      %s237 = smul.addr %s236, 4
      %s238 = scalar_lea.vmem %s2, %s237
      %p239 = pneg %p112
      %p240 = pneg %p109
      %p241 = pneg %p140
      %p242 = pneg %p137
      %p243 = scmp.lt.s32.totalorder %s19, 1
      %s244 = scalar_select %p243, %s19, 1
      %p245 = scmp.lt.s32.totalorder %s20, 0
      %s246 = scalar_select %p245, %s20, 0
      %s247 = smul.addr %s246, 2
      %s248 = smul.addr %s244, 2
      %s249 = sadd.s32 %s247, %s248
      %s250 = smul.addr %s249, 4
      %s251 = scalar_lea.vmem %s3, %s250
      %p252 = scmp.lt.s32.totalorder %s19, 1
      %s253 = scalar_select %p252, %s19, 1
      %p254 = scmp.lt.s32.totalorder %s20, 0
      %s255 = scalar_select %p254, %s20, 0
      %s256 = smul.addr %s255, 2
      %s257 = smul.addr %s253, 2
      %s258 = sadd.s32 %s256, %s257
      %s259 = smul.addr %s258, 4
      %s260 = scalar_lea.vmem %s0, %s259
      %s261 = smul.u32 2, %s21
      %p262 = scmp.lt.s32.totalorder %s19, 1
      %s263 = scalar_select %p262, %s19, 1
      %p264 = scmp.lt.s32.totalorder %s261, 1
      %s265 = scalar_select %p264, %s261, 1
      %s266 = smul.addr %s265, 2
      %s267 = smul.addr %s263, 4
      %s268 = sadd.s32 %s266, %s267
      %s269 = smul.addr %s268, 4
      %s270 = scalar_lea.vmem %s1, %s269
      %s271 = smul.u32 2, %s21
      %s272 = smul.u32 2, %s21
      %p273 = scmp.lt.s32.totalorder %s19, 1
      %s274 = scalar_select %p273, %s19, 1
      %p275 = scmp.lt.s32.totalorder %s272, 1
      %s276 = scalar_select %p275, %s272, 1
      %s277 = smul.addr %s276, 2
      %s278 = smul.addr %s274, 4
      %s279 = sadd.s32 %s277, %s278
      %s280 = smul.addr %s279, 4
      %s281 = scalar_lea.vmem %s2, %s280
      %s282 = smul.u32 2, %s21
      %p283 = scmp.lt.s32.totalorder %s19, 1
      %s284 = scalar_select %p283, %s19, 1
      %p285 = scmp.lt.s32.totalorder %s20, 0
      %s286 = scalar_select %p285, %s20, 0
      %s287 = smul.addr %s286, 2
      %s288 = smul.addr %s284, 2
      %s289 = sadd.s32 %s287, %s288
      %s290 = smul.addr %s289, 4
      %s291 = scalar_lea.vmem %s3, %s290
      %p293 = scmp.eq.s32.totalorder %s21, 0
      // Predicated region
      $region33: #{ring_cross_attention_forward.6} parent=31 // pred_check
        %p294 = pneg %p293
      $region34: #{ring_cross_attention_forward.6} parent=31 // pred_check_branch
        %296 = sbr.rel (%p294) target = $region36
      $region35: #{ring_cross_attention_forward.6} parent=31 // pred_region
        %vm297 = vcmask 15360
        %298 = vst.msk [vmem:[#allocation2] sm:$0xff] %vm297, -inf
        %299 = vst.msk [vmem:[#allocation3] sm:$0xff] %vm297, 0.0
        %300 = vst [vmem:[#allocation4] sm:$0xff] 0.0
        %301 = vst [vmem:[#allocation4 + $0x8] sm:$0xff] 0.0
      $region36: #{ring_cross_attention_forward.6} parent=31 // pred_fallthru
        _
      %v302 = vld [vmem:[#allocation2] sm:$0xff]
      %v303 = vld [vmem:[#allocation3] sm:$0xff]
      %v304 = vld [vmem:[%s260] sm:$0xf]
      %v305 = vld [vmem:[%s270] sm:$0xf]
      %v306 = vld [vmem:[%s270 + $0x8] sm:$0xf]
      %v307 = vld [vmem:[%s281] sm:$0xf]
      %v308 = vld [vmem:[%s281 + $0x8] sm:$0xf]
      %v309 = vld [vmem:[#allocation4] sm:$0xff]
      %v312 = vunpack.c.l.b16 %v305
      %v313 = vunpack.c.l.b16 %v306
      %v314 = vpack.c.b16 %v313, %v312
      %316 = vmatprep.subr.bf16.mxu0 0
      %317 = vmatpush1.bf16.xpose.msra.mxu0 %v314
      %318 = vmatprep.subr.bf16.mxu0 0
      %319 = vmatpush1.bf16.xpose.msra.mxu0 0
      %320 = vmatprep.subr.bf16.mxu0 0
      %321 = vmatpush1.bf16.xpose.msra.mxu0 0
      %322 = vmatprep.subr.bf16.mxu0 0
      %323 = vmatpush1.bf16.xpose.msra.mxu0 0
      %324 = vmatprep.subr.bf16.mxu0 0
      %325 = vmatpush1.bf16.xpose.msra.mxu0 0
      %326 = vmatprep.subr.bf16.mxu0 0
      %327 = vmatpush1.bf16.xpose.msra.mxu0 0
      %328 = vmatprep.subr.bf16.mxu0 0
      %329 = vmatpush1.bf16.xpose.msra.mxu0 0
      %330 = vmatprep.subr.bf16.mxu0 0
      %331 = vmatpush1.bf16.xpose.msra.mxu0 0
      %332 = vmatprep.subr.bf16.mxu0 0
      %333 = vmatpush1.bf16.xpose.msra.mxu0 0
      %334 = vmatprep.subr.bf16.mxu0 0
      %335 = vmatpush1.bf16.xpose.msra.mxu0 0
      %336 = vmatprep.subr.bf16.mxu0 0
      %337 = vmatpush1.bf16.xpose.msra.mxu0 0
      %338 = vmatprep.subr.bf16.mxu0 0
      %339 = vmatpush1.bf16.xpose.msra.mxu0 0
      %340 = vmatprep.subr.bf16.mxu0 0
      %341 = vmatpush1.bf16.xpose.msra.mxu0 0
      %342 = vmatprep.subr.bf16.mxu0 0
      %343 = vmatpush1.bf16.xpose.msra.mxu0 0
      %344 = vmatprep.subr.bf16.mxu0 0
      %345 = vmatpush1.bf16.xpose.msra.mxu0 0
      %346 = vmatprep.subr.bf16.mxu0 0
      %347 = vmatpush1.bf16.xpose.msra.mxu0 0
      %348 = vmatprep.mubr.bf16.mxu0 0
      %349 = vmatmul.mubr.bf16.gmra.mrb[0].mxu0 %v304
      %v350 = vpop.f32.mrb[0].mxu0
      %v351 = vadd.f32 0.0, %v350
      %v352 = vpop.f32.mrb[0].mxu0
      %v353 = vpop.f32.mrb[0].mxu0
      %v354 = vpop.f32.mrb[0].mxu0
      %355 = vdwg.mxu0
      %vm356 = vcmask 130048
      %v357 = vsel %vm356, %v351, -inf
      %358 = vmax.xlane.f32.xlu0 %v357
      %v359 = vpop.xlane.xlu0 %358
      %v360 = vmax.f32 %v302, %v359
      %v361 = vsub.f32 %v302, %v360
      %v362 = vmul.f32 %v361, 1.442695
      %v363 = vpow.pop %v362
      %365 = vset.pattern.permute.xlu0 0
      %366 = vperm.xlu0 %365, %v360
      %v367 = vpop.permute.xlu0 %366
      %v369 = vsub.f32 %v351, %v367
      %v370 = vmul.f32 %v369, 1.442695
      %v371 = vpow.pop %v370
      %v372 = vmul.f32 %v363, %v303
      %v373 = vsel %vm356, %v371, 0.0
      %374 = vadd.xlane.f32.xlu0 %v373
      %v375 = vpop.xlane.xlu0 %374
      %v376 = vadd.f32 %v372, %v375
      %378 = vset.pattern.permute.xlu0 0
      %379 = vperm.xlu0 %378, %v363
      %v380 = vpop.permute.xlu0 %379
      %v382 = vmul.f32 %v380, %v309
      %v383 = vpack.c.bf16 %v371, %v371
      %v386 = vunpack.c.l.b16 %v307
      %v387 = vunpack.c.l.b16 %v308
      %v388 = vpack.c.b16 %v387, %v386
      %v391 = vsel %vm356, %v383, 0
      %393 = vmatprep.subr.bf16.mxu0 0
      %394 = vmatpush1.bf16.msra.mxu0 %v388
      %395 = vmatprep.subr.bf16.mxu0 0
      %396 = vmatpush1.bf16.msra.mxu0 0
      %397 = vmatprep.subr.bf16.mxu0 0
      %398 = vmatpush1.bf16.msra.mxu0 0
      %399 = vmatprep.subr.bf16.mxu0 0
      %400 = vmatpush1.bf16.msra.mxu0 0
      %401 = vmatprep.subr.bf16.mxu0 0
      %402 = vmatpush1.bf16.msra.mxu0 0
      %403 = vmatprep.subr.bf16.mxu0 0
      %404 = vmatpush1.bf16.msra.mxu0 0
      %405 = vmatprep.subr.bf16.mxu0 0
      %406 = vmatpush1.bf16.msra.mxu0 0
      %407 = vmatprep.subr.bf16.mxu0 0
      %408 = vmatpush1.bf16.msra.mxu0 0
      %409 = vmatprep.subr.bf16.mxu0 0
      %410 = vmatpush1.bf16.msra.mxu0 0
      %411 = vmatprep.subr.bf16.mxu0 0
      %412 = vmatpush1.bf16.msra.mxu0 0
      %413 = vmatprep.subr.bf16.mxu0 0
      %414 = vmatpush1.bf16.msra.mxu0 0
      %415 = vmatprep.subr.bf16.mxu0 0
      %416 = vmatpush1.bf16.msra.mxu0 0
      %417 = vmatprep.subr.bf16.mxu0 0
      %418 = vmatpush1.bf16.msra.mxu0 0
      %419 = vmatprep.subr.bf16.mxu0 0
      %420 = vmatpush1.bf16.msra.mxu0 0
      %421 = vmatprep.subr.bf16.mxu0 0
      %422 = vmatpush1.bf16.msra.mxu0 0
      %423 = vmatprep.subr.bf16.mxu0 0
      %424 = vmatpush1.bf16.msra.mxu0 0
      %425 = vmatprep.mubr.bf16.mxu0 0
      %426 = vmatmul.mubr.bf16.gmra.mrb[0].mxu0 %v391
      %v427 = vpop.f32.mrb[0].mxu0
      %v428 = vadd.f32 0.0, %v427
      %v429 = vpop.f32.mrb[0].mxu0
      %v430 = vpop.f32.mrb[0].mxu0
      %v431 = vpop.f32.mrb[0].mxu0
      %432 = vdwg.mxu0
      %v433 = vadd.f32 %v382, %v428
      %434 = vst [vmem:[#allocation4] sm:$0xff] %v433
      %v435 = vld [vmem:[%s260 + $0x4] sm:$0xf]
      %v436 = vld [vmem:[%s270 + $0x4] sm:$0xf]
      %v437 = vld [vmem:[%s270 + $0xc] sm:$0xf]
      %v438 = vld [vmem:[%s281 + $0x4] sm:$0xf]
      %v439 = vld [vmem:[%s281 + $0xc] sm:$0xf]
      %v440 = vld [vmem:[#allocation4 + $0x8] sm:$0xff]
      %v443 = vunpack.c.l.b16 %v436
      %v444 = vunpack.c.l.b16 %v437
      %v445 = vpack.c.b16 %v444, %v443
      %447 = vmatprep.subr.bf16.mxu0 0
      %448 = vmatpush1.bf16.xpose.msra.mxu0 %v445
      %449 = vmatprep.subr.bf16.mxu0 0
      %450 = vmatpush1.bf16.xpose.msra.mxu0 0
      %451 = vmatprep.subr.bf16.mxu0 0
      %452 = vmatpush1.bf16.xpose.msra.mxu0 0
      %453 = vmatprep.subr.bf16.mxu0 0
      %454 = vmatpush1.bf16.xpose.msra.mxu0 0
      %455 = vmatprep.subr.bf16.mxu0 0
      %456 = vmatpush1.bf16.xpose.msra.mxu0 0
      %457 = vmatprep.subr.bf16.mxu0 0
      %458 = vmatpush1.bf16.xpose.msra.mxu0 0
      %459 = vmatprep.subr.bf16.mxu0 0
      %460 = vmatpush1.bf16.xpose.msra.mxu0 0
      %461 = vmatprep.subr.bf16.mxu0 0
      %462 = vmatpush1.bf16.xpose.msra.mxu0 0
      %463 = vmatprep.subr.bf16.mxu0 0
      %464 = vmatpush1.bf16.xpose.msra.mxu0 0
      %465 = vmatprep.subr.bf16.mxu0 0
      %466 = vmatpush1.bf16.xpose.msra.mxu0 0
      %467 = vmatprep.subr.bf16.mxu0 0
      %468 = vmatpush1.bf16.xpose.msra.mxu0 0
      %469 = vmatprep.subr.bf16.mxu0 0
      %470 = vmatpush1.bf16.xpose.msra.mxu0 0
      %471 = vmatprep.subr.bf16.mxu0 0
      %472 = vmatpush1.bf16.xpose.msra.mxu0 0
      %473 = vmatprep.subr.bf16.mxu0 0
      %474 = vmatpush1.bf16.xpose.msra.mxu0 0
      %475 = vmatprep.subr.bf16.mxu0 0
      %476 = vmatpush1.bf16.xpose.msra.mxu0 0
      %477 = vmatprep.subr.bf16.mxu0 0
      %478 = vmatpush1.bf16.xpose.msra.mxu0 0
      %479 = vmatprep.mubr.bf16.mxu0 0
      %480 = vmatmul.mubr.bf16.gmra.mrb[0].mxu0 %v435
      %v481 = vpop.f32.mrb[0].mxu0
      %v482 = vadd.f32 0.0, %v481
      %v483 = vpop.f32.mrb[0].mxu0
      %v484 = vpop.f32.mrb[0].mxu0
      %v485 = vpop.f32.mrb[0].mxu0
      %486 = vdwg.mxu0
      %v487 = vsel %vm356, %v482, -inf
      %488 = vmax.xlane.f32.xlu0 %v487
      %v489 = vpop.xlane.xlu0 %488
      %v490 = vmax.f32 %v302, %v489
      %v491 = vsub.f32 %v302, %v490
      %v492 = vmul.f32 %v491, 1.442695
      %v493 = vpow.pop %v492
      %495 = vset.pattern.permute.xlu0 1
      %496 = vperm.xlu0 %495, %v490
      %v497 = vpop.permute.xlu0 %496
      %v499 = vsub.f32 %v482, %v497
      %v500 = vmul.f32 %v499, 1.442695
      %v501 = vpow.pop %v500
      %v502 = vmul.f32 %v493, %v303
      %v503 = vsel %vm356, %v501, 0.0
      %504 = vadd.xlane.f32.xlu0 %v503
      %v505 = vpop.xlane.xlu0 %504
      %v506 = vadd.f32 %v502, %v505
      %508 = vset.pattern.permute.xlu0 1
      %509 = vperm.xlu0 %508, %v493
      %v510 = vpop.permute.xlu0 %509
      %v512 = vmul.f32 %v510, %v440
      %v513 = vpack.c.bf16 %v501, %v501
      %v516 = vunpack.c.l.b16 %v438
      %v517 = vunpack.c.l.b16 %v439
      %v518 = vpack.c.b16 %v517, %v516
      %v521 = vsel %vm356, %v513, 0
      %523 = vmatprep.subr.bf16.mxu0 0
      %524 = vmatpush1.bf16.msra.mxu0 %v518
      %525 = vmatprep.subr.bf16.mxu0 0
      %526 = vmatpush1.bf16.msra.mxu0 0
      %527 = vmatprep.subr.bf16.mxu0 0
      %528 = vmatpush1.bf16.msra.mxu0 0
      %529 = vmatprep.subr.bf16.mxu0 0
      %530 = vmatpush1.bf16.msra.mxu0 0
      %531 = vmatprep.subr.bf16.mxu0 0
      %532 = vmatpush1.bf16.msra.mxu0 0
      %533 = vmatprep.subr.bf16.mxu0 0
      %534 = vmatpush1.bf16.msra.mxu0 0
      %535 = vmatprep.subr.bf16.mxu0 0
      %536 = vmatpush1.bf16.msra.mxu0 0
      %537 = vmatprep.subr.bf16.mxu0 0
      %538 = vmatpush1.bf16.msra.mxu0 0
      %539 = vmatprep.subr.bf16.mxu0 0
      %540 = vmatpush1.bf16.msra.mxu0 0
      %541 = vmatprep.subr.bf16.mxu0 0
      %542 = vmatpush1.bf16.msra.mxu0 0
      %543 = vmatprep.subr.bf16.mxu0 0
      %544 = vmatpush1.bf16.msra.mxu0 0
      %545 = vmatprep.subr.bf16.mxu0 0
      %546 = vmatpush1.bf16.msra.mxu0 0
      %547 = vmatprep.subr.bf16.mxu0 0
      %548 = vmatpush1.bf16.msra.mxu0 0
      %549 = vmatprep.subr.bf16.mxu0 0
      %550 = vmatpush1.bf16.msra.mxu0 0
      %551 = vmatprep.subr.bf16.mxu0 0
      %552 = vmatpush1.bf16.msra.mxu0 0
      %553 = vmatprep.subr.bf16.mxu0 0
      %554 = vmatpush1.bf16.msra.mxu0 0
      %555 = vmatprep.mubr.bf16.mxu0 0
      %556 = vmatmul.mubr.bf16.gmra.mrb[0].mxu0 %v521
      %v557 = vpop.f32.mrb[0].mxu0
      %v558 = vadd.f32 0.0, %v557
      %v559 = vpop.f32.mrb[0].mxu0
      %v560 = vpop.f32.mrb[0].mxu0
      %v561 = vpop.f32.mrb[0].mxu0
      %562 = vdwg.mxu0
      %v563 = vadd.f32 %v512, %v558
      %564 = vst [vmem:[#allocation4 + $0x8] sm:$0xff] %v563
      %vm565 = vcmask 7168
      %v566 = vsel %vm565, %v360, %v490
      %vm567 = vcmask 15360
      %568 = vst.msk [vmem:[#allocation2] sm:$0xff] %vm567, %v566
      %v569 = vsel %vm565, %v376, %v506
      %570 = vst.msk [vmem:[#allocation3] sm:$0xff] %vm567, %v569
      // Predicated region
      $region37: #{ring_cross_attention_forward.6} parent=31 // pred_check
        %p571 = pneg %p293
      $region38: #{ring_cross_attention_forward.6} parent=31 // pred_check_branch
        %573 = sbr.rel (%p571) target = $region40
      $region39: #{ring_cross_attention_forward.6} parent=31 // pred_region
        %v574 = vld [vmem:[#allocation3] sm:$0xff]
        %v575 = vrcp.pop %v574
        %v576 = vld [vmem:[#allocation4] sm:$0xff]
        %578 = vset.pattern.permute.xlu0 0
        %579 = vperm.xlu0 %578, %v575
        %v580 = vpop.permute.xlu0 %579
        %v582 = vmul.f32 %v576, %v580
        %v583 = vpack.c.bf16 %v582, %v582
        %584 = vst [vmem:[%s291] sm:$0xf] %v583
        %v585 = vld [vmem:[#allocation4 + $0x8] sm:$0xff]
        %586 = vset.pattern.permute.xlu0 1
        %587 = vperm.xlu0 %586, %v575
        %v588 = vpop.permute.xlu0 %587
        %v590 = vmul.f32 %v585, %v588
        %v591 = vpack.c.bf16 %v590, %v590
        %592 = vst [vmem:[%s291 + $0x4] sm:$0xf] %v591
      $region40: #{ring_cross_attention_forward.6} parent=31 // pred_fallthru
        _
      %p593 = scmp.lt.s32.totalorder %s19, 1
      %s594 = scalar_select %p593, %s19, 1
      %p595 = scmp.lt.s32.totalorder %s20, 0
      %s596 = scalar_select %p595, %s20, 0
      %s597 = smul.addr %s596, 2
      %s598 = smul.addr %s594, 2
      %s599 = sadd.s32 %s597, %s598
      %s600 = smul.addr %s599, 4
      %s601 = scalar_lea.vmem %s3, %s600
      // Predicated region
      $region41: #{ring_cross_attention_forward.6} parent=31 // pred_check
        %p602 = pneg %p137
      $region42: #{ring_cross_attention_forward.6} parent=31 // pred_check_branch
        %604 = sbr.rel (%p602) target = $region44
      $region43: #{ring_cross_attention_forward.6} parent=31 // pred_region
        _
      $region44: #{ring_cross_attention_forward.6} parent=31 // pred_fallthru
        _
    $region32: #{ring_cross_attention_forward.6} parent=5 // pred_fallthru
      _
    %p605 = scmp.le.s32.totalorder 2, %s9
    // Predicated region
    $region45: #{ring_cross_attention_forward.6} parent=5 // pred_check
      %p606 = pneg %p605
    $region46: #{ring_cross_attention_forward.6} parent=5 // pred_check_branch
      %608 = sbr.rel (%p606) target = $region48
    $region47: #{ring_cross_attention_forward.6} parent=5 // pred_region
      %s609 = ssub.s32 %s9, 2
      // Predicated region
      $region49: #{ring_cross_attention_forward.6} parent=47 // pred_check
        %p610 = pneg %p143
      $region50: #{ring_cross_attention_forward.6} parent=47 // pred_check_branch
        %612 = sbr.rel (%p610) target = $region52
      $region51: #{ring_cross_attention_forward.6} parent=47 // pred_region
        %p613 = scmp.lt.s32.totalorder %s22, 1
        %s614 = scalar_select %p613, %s22, 1
        %p615 = scmp.lt.s32.totalorder %s23, 0
        %s616 = scalar_select %p615, %s23, 0
        %s617 = smul.addr %s616, 2
        %s618 = smul.addr %s614, 2
        %s619 = sadd.s32 %s617, %s618
        %s620 = smul.addr %s619, 4
        %s621 = scalar_lea.vmem %s3, %s620
      $region52: #{ring_cross_attention_forward.6} parent=47 // pred_fallthru
        _
    $region48: #{ring_cross_attention_forward.6} parent=5 // pred_fallthru
      _
  $region6: #{ring_cross_attention_forward.6} parent=0 // loop_footer
    %s13 = sadd.s32 1, %s9
  $region7: #{ring_cross_attention_forward.6} parent=0 // loop_footer_branch
    %8 = sbr.rel target = $region3
  $region8: #{ring_cross_attention_forward.6} parent=0 // loop_exit
    _

</llo_original>
